<compile_context>
chip_gen: v7x
topology: tpu7x:2x2x1
jax: 0.10.0
libtpu: 0.0.40
codegen_flags: <defaults>
</compile_context>

<pallas_src>
import math

import jax
import jax.numpy as jnp
from jax.experimental import pallas as pl
from jax.experimental.pallas import tpu as pltpu


def _round_up(n, m):
    return ((n + m - 1) // m) * m


# ----------------------------------------------------------------------------
# Kernel: whole forward for one batch tile. Weight groups are pre-packed with
# 128-aligned segments so each layer is a single wide-K MXU matmul against the
# incrementally-built [x | a | b | c] feature scratch.
# ----------------------------------------------------------------------------
def mlp_kernel(x_ref,
               w1_ref, p1_ref,
               w2_ref, p2_ref,
               w3_ref, p3_ref,
               wo_ref, p4_ref,
               o_ref, feat_ref):
    f32 = jnp.float32
    bf16 = jnp.bfloat16
    Ip = x_ref.shape[1]      # padded input width  (multiple of 128)
    Hp = w1_ref.shape[1]     # padded hidden width (multiple of 128)

    def taaf(z, p_ref):
        # p rows: [alpha_bottom, beta_bottom, top_scale(=alpha_top*bn_scale),
        #          top_shift(=bn_scale*beta_top + bn_shift)] ; f32 math.
        p = p_ref[...]
        return p[2:3, :] * jnp.tanh(p[0:1, :] * z + p[1:2, :]) + p[3:4, :]

    x = x_ref[...]                                   # bf16 (cast in wrapper)
    feat_ref[:, pl.ds(0, Ip)] = x

    # layer 1 : x @ W1
    z1 = jnp.dot(x, w1_ref[...], preferred_element_type=f32)
    a = taaf(z1, p1_ref)
    feat_ref[:, pl.ds(Ip, Hp)] = a.astype(bf16)

    # layer 2 : [x, a] @ W2   (single wide-K dot)
    z2 = jnp.dot(feat_ref[:, pl.ds(0, Ip + Hp)], w2_ref[...],
                 preferred_element_type=f32)
    b = taaf(z2, p2_ref)
    feat_ref[:, pl.ds(Ip + Hp, Hp)] = b.astype(bf16)

    # layer 3 : [x, a, b] @ W3
    z3 = jnp.dot(feat_ref[:, pl.ds(0, Ip + 2 * Hp)], w3_ref[...],
                 preferred_element_type=f32)
    c = taaf(z3, p3_ref)
    feat_ref[:, pl.ds(Ip + 2 * Hp, Hp)] = c.astype(bf16)

    # output layer : [x, a, b, c] @ Wout
    zo = jnp.dot(feat_ref[...], wo_ref[...], preferred_element_type=f32)
    o_ref[...] = taaf(zo, p4_ref).astype(o_ref.dtype)


# ----------------------------------------------------------------------------
# Wrapper
# ----------------------------------------------------------------------------
def pack_params(params, in_size, n_hidden, out_size):
    """Pad every feature segment to a multiple of 128 lanes and stack the
    per-layer weight groups into single wide-K (fan_in_packed, fan_out) bf16
    matrices. Per-feature TAAF/BN params stay f32."""
    I, H, O = in_size, n_hidden, out_size
    Ip, Hp, Op = _round_up(I, 128), _round_up(H, 128), _round_up(O, 128)

    def place(dst, w, row0):
        return dst.at[row0:row0 + w.shape[0], :w.shape[1]].set(w)

    w1p = place(jnp.zeros((Ip, Hp), jnp.float32), params["w1"], 0)

    w2p = jnp.zeros((Ip + Hp, Hp), jnp.float32)
    w2p = place(w2p, params["w2x"], 0)
    w2p = place(w2p, params["w2a"], Ip)

    w3p = jnp.zeros((Ip + 2 * Hp, Hp), jnp.float32)
    w3p = place(w3p, params["w3x"], 0)
    w3p = place(w3p, params["w3a"], Ip)
    w3p = place(w3p, params["w3b"], Ip + Hp)

    wop = jnp.zeros((Ip + 3 * Hp, Op), jnp.float32)
    wop = place(wop, params["wox"], 0)
    wop = place(wop, params["woa"], Ip)
    wop = place(wop, params["wob"], Ip + Hp)
    wop = place(wop, params["woc"], Ip + 2 * Hp)

    def pad_p(p, width):   # zero-padded columns -> TAAF(0)=0 on pad lanes
        return jnp.zeros((4, width), jnp.float32).at[:, :p.shape[1]].set(p)

    packed = {
        "w1": w1p.astype(jnp.bfloat16),
        "w2": w2p.astype(jnp.bfloat16),
        "w3": w3p.astype(jnp.bfloat16),
        "wo": wop.astype(jnp.bfloat16),
        "p1": pad_p(params["p1"], Hp),
        "p2": pad_p(params["p2"], Hp),
        "p3": pad_p(params["p3"], Hp),
        "p4": pad_p(params["p4"], Op),
    }
    return packed, (Ip, Hp, Op)


def dropout_mlp_forward(x, packed, dims, *, out_size, tm=None):
    B, I = x.shape
    Ip, Hp, Op = dims

    # Batch tile: big enough to feed the MXU / pipeline, multiple of 16 for
    # bf16 sublane packing; many grid steps at production batch sizes.
    if tm is None:
        tm = 256 if B >= 256 else _round_up(B, 16)
    Bp = _round_up(B, tm)

    x_p = jnp.zeros((Bp, Ip), jnp.bfloat16).at[:B, :I].set(
        x.astype(jnp.bfloat16))

    flat = [packed[k] for k in ("w1", "p1", "w2", "p2", "w3", "p3", "wo", "p4")]
    wbytes = sum(int(w.size) * w.dtype.itemsize for w in flat)

    flops = 2 * Bp * (Ip * Hp + (Ip + Hp) * Hp + (Ip + 2 * Hp) * Hp
                      + (Ip + 3 * Hp) * Op)
    transcendentals = Bp * (3 * Hp + Op)
    bytes_accessed = wbytes + Bp * Ip * 2 + Bp * Op * 4
    cost = pl.CostEstimate(flops=flops, transcendentals=transcendentals,
                           bytes_accessed=bytes_accessed)

    def run(single_buffer_weights):
        def const_spec(shape):
            if single_buffer_weights:
                return pl.BlockSpec(shape, lambda i: (0, 0),
                                    pipeline_mode=pl.Buffered(1))
            return pl.BlockSpec(shape, lambda i: (0, 0))

        in_specs = [pl.BlockSpec((tm, Ip), lambda i: (i, 0))]
        in_specs += [const_spec(w.shape) for w in flat]
        out_spec = pl.BlockSpec((tm, Op), lambda i: (i, 0))   # lane-dense (Op%128==0)

        # scoped-VMEM budget: resident weights (+params), double-buffered x/out
        # streams, feature scratch, f32 temporaries; 25% headroom, <= 64 MiB.
        est = (wbytes * (1 if single_buffer_weights else 2)
               + 2 * tm * Ip * 2              # x tile, bf16, double-buffered
               + 2 * tm * Op * 4              # out tile, f32, double-buffered
               + tm * (Ip + 3 * Hp) * 2       # feature scratch, bf16
               + 6 * tm * Hp * 4 + 2 * tm * Op * 4)   # f32 activation temps
        vmem_limit = min(max(int(est * 1.25), 32 * 1024 * 1024),
                         64 * 1024 * 1024)

        call = pl.pallas_call(
            mlp_kernel,
            out_shape=jax.ShapeDtypeStruct((Bp, Op), jnp.float32),
            grid_spec=pltpu.PrefetchScalarGridSpec(
                num_scalar_prefetch=0,
                grid=(Bp // tm,),
                in_specs=in_specs,
                out_specs=out_spec,
                scratch_shapes=[pltpu.VMEM((tm, Ip + 3 * Hp), jnp.bfloat16)],
            ),
            compiler_params=pltpu.CompilerParams(
                dimension_semantics=("parallel",),
                vmem_limit_bytes=vmem_limit,
            ),
            cost_estimate=cost,
        )
        return call(x_p, *flat)

    try:
        out_p = run(single_buffer_weights=True)
    except Exception:
        # pipeline_mode=Buffered(1) not supported in this JAX build ->
        # fall back to default (double-buffered) constant-index weight specs.
        out_p = run(single_buffer_weights=False)

    return out_p[:B, :out_size]


# ----------------------------------------------------------------------------
# Parameter init mirroring DropoutMLP.__init__ (eval mode) + pure-JAX reference
# ----------------------------------------------------------------------------
def make_params(key, in_size, n_hidden, out_size):
    eps = 1e-5
    bn_scale = 1.0 / math.sqrt(1.0 + eps)   # gamma=1, running_var=1
    bn_shift = 0.0                          # beta=0, running_mean=0

    def linear_w(k, fan_in, fan_out):
        bound = 1.0 / math.sqrt(fan_in)     # torch Linear default
        return jax.random.uniform(k, (fan_in, fan_out), jnp.float32,
                                  -bound, bound)

    def taaf_params(width, with_bn):
        ab = jnp.ones((width,), jnp.float32)    # alpha_bottom
        bb = jnp.zeros((width,), jnp.float32)   # beta_bottom
        at = jnp.ones((width,), jnp.float32)    # alpha_top
        bt = jnp.zeros((width,), jnp.float32)   # beta_top
        if with_bn:
            ts = bn_scale * at
            tb = bn_scale * bt + bn_shift
        else:
            ts, tb = at, bt
        return jnp.stack([ab, bb, ts, tb], axis=0)  # (4, width)

    keys = jax.random.split(key, 10)
    H, I, O = n_hidden, in_size, out_size
    return {
        "w1":  linear_w(keys[0], I, H), "p1": taaf_params(H, True),
        "w2x": linear_w(keys[1], I, H), "w2a": linear_w(keys[2], H, H),
        "p2":  taaf_params(H, True),
        "w3x": linear_w(keys[3], I, H), "w3a": linear_w(keys[4], H, H),
        "w3b": linear_w(keys[5], H, H), "p3": taaf_params(H, True),
        "wox": linear_w(keys[6], I, O), "woa": linear_w(keys[7], H, O),
        "wob": linear_w(keys[8], H, O), "woc": linear_w(keys[9], H, O),
        "p4":  taaf_params(O, False),
    }


def reference_forward(x, p):
    """Plain-JAX reference of the same eval-mode forward, mimicking the
    kernel's bf16 matmul inputs with f32 accumulation."""
    f32 = jnp.float32
    bf = lambda t: t.astype(jnp.bfloat16)

    def taaf(z, pm):
        return pm[2:3] * jnp.tanh(pm[0:1] * z + pm[1:2]) + pm[3:4]

    def mm(u, w):
        return jnp.dot(bf(u), bf(w), preferred_element_type=f32)

    a = taaf(mm(x, p["w1"]), p["p1"])
    b = taaf(mm(x, p["w2x"]) + mm(a, p["w2a"]), p["p2"])
    c = taaf(mm(x, p["w3x"]) + mm(a, p["w3a"]) + mm(b, p["w3b"]), p["p3"])
    y = taaf(mm(x, p["wox"]) + mm(a, p["woa"]) + mm(b, p["wob"])
             + mm(c, p["woc"]), p["p4"])
    return y


if __name__ == "__main__":
    B, in_size, n_hidden, out_size = 8, 16, 32, 8

    key = jax.random.PRNGKey(0)
    kx, kp = jax.random.split(key)
    x = jax.random.normal(kx, (B, in_size), jnp.float32)
    params = make_params(kp, in_size, n_hidden, out_size)
    packed, dims = pack_params(params, in_size, n_hidden, out_size)

    y = dropout_mlp_forward(x, packed, dims, out_size=out_size)
    y = jax.block_until_ready(y)

    y_ref = reference_forward(x, params)
    assert y.shape == (B, out_size)
    assert jnp.allclose(y, y_ref, atol=1e-2, rtol=1e-2), \
        float(jnp.max(jnp.abs(y - y_ref)))

    # TODO(synk): Dropout2d / BatchNorm1d training-mode (batch statistics +
    # random channel mask) semantics are not implemented; kernel reproduces
    # eval/inference behavior only.
    print("KERNEL_OK")
</pallas_src>

<mosaic_0001>
module attributes {stable_mosaic.version = 11 : i64} {
  func.func @mlp_kernel(%arg0: i32, %arg1: memref<16x128xbf16, #tpu.memory_space<vmem>>, %arg2: memref<128x128xbf16, #tpu.memory_space<vmem>>, %arg3: memref<4x128xf32, #tpu.memory_space<vmem>>, %arg4: memref<256x128xbf16, #tpu.memory_space<vmem>>, %arg5: memref<4x128xf32, #tpu.memory_space<vmem>>, %arg6: memref<384x128xbf16, #tpu.memory_space<vmem>>, %arg7: memref<4x128xf32, #tpu.memory_space<vmem>>, %arg8: memref<512x128xbf16, #tpu.memory_space<vmem>>, %arg9: memref<4x128xf32, #tpu.memory_space<vmem>>, %arg10: memref<16x128xf32, #tpu.memory_space<vmem>>, %arg11: memref<16x512xbf16, #tpu.memory_space<vmem>>) attributes {dimension_semantics = [#tpu.dimension_semantics<parallel>], iteration_bounds = array<i64: 1>, scalar_prefetch = 0 : i64, scratch_operands = 1 : i64, tpu.core_type = #tpu.core_type<tc>, window_params = [{transform_indices = @transform_0, window_bounds = array<i64: 16, 128>}, {pipeline_mode = #tpu.pipeline_mode<synchronous>, transform_indices = @transform_1, window_bounds = array<i64: 128, 128>}, {pipeline_mode = #tpu.pipeline_mode<synchronous>, transform_indices = @transform_2, window_bounds = array<i64: 4, 128>}, {pipeline_mode = #tpu.pipeline_mode<synchronous>, transform_indices = @transform_3, window_bounds = array<i64: 256, 128>}, {pipeline_mode = #tpu.pipeline_mode<synchronous>, transform_indices = @transform_4, window_bounds = array<i64: 4, 128>}, {pipeline_mode = #tpu.pipeline_mode<synchronous>, transform_indices = @transform_5, window_bounds = array<i64: 384, 128>}, {pipeline_mode = #tpu.pipeline_mode<synchronous>, transform_indices = @transform_6, window_bounds = array<i64: 4, 128>}, {pipeline_mode = #tpu.pipeline_mode<synchronous>, transform_indices = @transform_7, window_bounds = array<i64: 512, 128>}, {pipeline_mode = #tpu.pipeline_mode<synchronous>, transform_indices = @transform_8, window_bounds = array<i64: 4, 128>}, {transform_indices = @transform_9, window_bounds = array<i64: 16, 128>}]} {
    %c0 = arith.constant 0 : index
    %c0_0 = arith.constant 0 : index
    %0 = vector.load %arg1[%c0, %c0_0] : memref<16x128xbf16, #tpu.memory_space<vmem>>, vector<16x128xbf16>
    %c0_1 = arith.constant 0 : index
    %c0_2 = arith.constant 0 : index
    %1 = vector.load %arg11[%c0_1, %c0_2] : memref<16x512xbf16, #tpu.memory_space<vmem>>, vector<16x128xbf16>
    tpu.vector_store %arg11[%c0_1, %c0_2], %0 {strides = array<i32>} : memref<16x512xbf16, #tpu.memory_space<vmem>>, vector<16x128xbf16>,
    %c0_3 = arith.constant 0 : index
    %c0_4 = arith.constant 0 : index
    %2 = vector.load %arg2[%c0_3, %c0_4] : memref<128x128xbf16, #tpu.memory_space<vmem>>, vector<128x128xbf16>
    %cst = arith.constant dense<0.000000e+00> : vector<16x128xf32>
    %3 = tpu.matmul %0, %2, %cst {dimension_numbers = #tpu.dot_dimension_numbers<[1], [0], [0], [1], [0, 0, 1, 1], [], []>} : vector<16x128xbf16>, vector<128x128xbf16>, vector<16x128xf32> -> vector<16x128xf32>
    %c0_5 = arith.constant 0 : index
    %c0_6 = arith.constant 0 : index
    %4 = vector.load %arg3[%c0_5, %c0_6] : memref<4x128xf32, #tpu.memory_space<vmem>>, vector<4x128xf32>
    %5 = vector.extract_strided_slice %4 {offsets = [2, 0], sizes = [1, 128], strides = [1, 1]} : vector<4x128xf32> to vector<1x128xf32>
    %6 = vector.extract_strided_slice %4 {offsets = [0, 0], sizes = [1, 128], strides = [1, 1]} : vector<4x128xf32> to vector<1x128xf32>
    %7 = vector.broadcast %6 : vector<1x128xf32> to vector<16x128xf32>
    %8 = arith.mulf %7, %3 : vector<16x128xf32>
    %9 = vector.extract_strided_slice %4 {offsets = [1, 0], sizes = [1, 128], strides = [1, 1]} : vector<4x128xf32> to vector<1x128xf32>
    %10 = vector.broadcast %9 : vector<1x128xf32> to vector<16x128xf32>
    %11 = arith.addf %8, %10 : vector<16x128xf32>
    %12 = math.tanh %11 : vector<16x128xf32>
    %13 = vector.broadcast %5 : vector<1x128xf32> to vector<16x128xf32>
    %14 = arith.mulf %13, %12 : vector<16x128xf32>
    %15 = vector.extract_strided_slice %4 {offsets = [3, 0], sizes = [1, 128], strides = [1, 1]} : vector<4x128xf32> to vector<1x128xf32>
    %16 = vector.broadcast %15 : vector<1x128xf32> to vector<16x128xf32>
    %17 = arith.addf %14, %16 : vector<16x128xf32>
    %18 = arith.truncf %17 : vector<16x128xf32> to vector<16x128xbf16>
    %c0_7 = arith.constant 0 : index
    %c128 = arith.constant 128 : index
    %19 = vector.load %arg11[%c0_7, %c128] : memref<16x512xbf16, #tpu.memory_space<vmem>>, vector<16x128xbf16>
    tpu.vector_store %arg11[%c0_7, %c128], %18 {strides = array<i32>} : memref<16x512xbf16, #tpu.memory_space<vmem>>, vector<16x128xbf16>,
    %c0_8 = arith.constant 0 : index
    %c0_9 = arith.constant 0 : index
    %20 = vector.load %arg11[%c0_8, %c0_9] : memref<16x512xbf16, #tpu.memory_space<vmem>>, vector<16x256xbf16>
    %c0_10 = arith.constant 0 : index
    %c0_11 = arith.constant 0 : index
    %21 = vector.load %arg4[%c0_10, %c0_11] : memref<256x128xbf16, #tpu.memory_space<vmem>>, vector<256x128xbf16>
    %cst_12 = arith.constant dense<0.000000e+00> : vector<16x128xf32>
    %22 = tpu.matmul %20, %21, %cst_12 {dimension_numbers = #tpu.dot_dimension_numbers<[1], [0], [0], [1], [0, 0, 1, 1], [], []>} : vector<16x256xbf16>, vector<256x128xbf16>, vector<16x128xf32> -> vector<16x128xf32>
    %c0_13 = arith.constant 0 : index
    %c0_14 = arith.constant 0 : index
    %23 = vector.load %arg5[%c0_13, %c0_14] : memref<4x128xf32, #tpu.memory_space<vmem>>, vector<4x128xf32>
    %24 = vector.extract_strided_slice %23 {offsets = [2, 0], sizes = [1, 128], strides = [1, 1]} : vector<4x128xf32> to vector<1x128xf32>
    %25 = vector.extract_strided_slice %23 {offsets = [0, 0], sizes = [1, 128], strides = [1, 1]} : vector<4x128xf32> to vector<1x128xf32>
    %26 = vector.broadcast %25 : vector<1x128xf32> to vector<16x128xf32>
    %27 = arith.mulf %26, %22 : vector<16x128xf32>
    %28 = vector.extract_strided_slice %23 {offsets = [1, 0], sizes = [1, 128], strides = [1, 1]} : vector<4x128xf32> to vector<1x128xf32>
    %29 = vector.broadcast %28 : vector<1x128xf32> to vector<16x128xf32>
    %30 = arith.addf %27, %29 : vector<16x128xf32>
    %31 = math.tanh %30 : vector<16x128xf32>
    %32 = vector.broadcast %24 : vector<1x128xf32> to vector<16x128xf32>
    %33 = arith.mulf %32, %31 : vector<16x128xf32>
    %34 = vector.extract_strided_slice %23 {offsets = [3, 0], sizes = [1, 128], strides = [1, 1]} : vector<4x128xf32> to vector<1x128xf32>
    %35 = vector.broadcast %34 : vector<1x128xf32> to vector<16x128xf32>
    %36 = arith.addf %33, %35 : vector<16x128xf32>
    %37 = arith.truncf %36 : vector<16x128xf32> to vector<16x128xbf16>
    %c0_15 = arith.constant 0 : index
    %c256 = arith.constant 256 : index
    %38 = vector.load %arg11[%c0_15, %c256] : memref<16x512xbf16, #tpu.memory_space<vmem>>, vector<16x128xbf16>
    tpu.vector_store %arg11[%c0_15, %c256], %37 {strides = array<i32>} : memref<16x512xbf16, #tpu.memory_space<vmem>>, vector<16x128xbf16>,
    %c0_16 = arith.constant 0 : index
    %c0_17 = arith.constant 0 : index
    %39 = vector.load %arg11[%c0_16, %c0_17] : memref<16x512xbf16, #tpu.memory_space<vmem>>, vector<16x384xbf16>
    %c0_18 = arith.constant 0 : index
    %c0_19 = arith.constant 0 : index
    %40 = vector.load %arg6[%c0_18, %c0_19] : memref<384x128xbf16, #tpu.memory_space<vmem>>, vector<384x128xbf16>
    %cst_20 = arith.constant dense<0.000000e+00> : vector<16x128xf32>
    %41 = tpu.matmul %39, %40, %cst_20 {dimension_numbers = #tpu.dot_dimension_numbers<[1], [0], [0], [1], [0, 0, 1, 1], [], []>} : vector<16x384xbf16>, vector<384x128xbf16>, vector<16x128xf32> -> vector<16x128xf32>
    %c0_21 = arith.constant 0 : index
    %c0_22 = arith.constant 0 : index
    %42 = vector.load %arg7[%c0_21, %c0_22] : memref<4x128xf32, #tpu.memory_space<vmem>>, vector<4x128xf32>
    %43 = vector.extract_strided_slice %42 {offsets = [2, 0], sizes = [1, 128], strides = [1, 1]} : vector<4x128xf32> to vector<1x128xf32>
    %44 = vector.extract_strided_slice %42 {offsets = [0, 0], sizes = [1, 128], strides = [1, 1]} : vector<4x128xf32> to vector<1x128xf32>
    %45 = vector.broadcast %44 : vector<1x128xf32> to vector<16x128xf32>
    %46 = arith.mulf %45, %41 : vector<16x128xf32>
    %47 = vector.extract_strided_slice %42 {offsets = [1, 0], sizes = [1, 128], strides = [1, 1]} : vector<4x128xf32> to vector<1x128xf32>
    %48 = vector.broadcast %47 : vector<1x128xf32> to vector<16x128xf32>
    %49 = arith.addf %46, %48 : vector<16x128xf32>
    %50 = math.tanh %49 : vector<16x128xf32>
    %51 = vector.broadcast %43 : vector<1x128xf32> to vector<16x128xf32>
    %52 = arith.mulf %51, %50 : vector<16x128xf32>
    %53 = vector.extract_strided_slice %42 {offsets = [3, 0], sizes = [1, 128], strides = [1, 1]} : vector<4x128xf32> to vector<1x128xf32>
    %54 = vector.broadcast %53 : vector<1x128xf32> to vector<16x128xf32>
    %55 = arith.addf %52, %54 : vector<16x128xf32>
    %56 = arith.truncf %55 : vector<16x128xf32> to vector<16x128xbf16>
    %c0_23 = arith.constant 0 : index
    %c384 = arith.constant 384 : index
    %57 = vector.load %arg11[%c0_23, %c384] : memref<16x512xbf16, #tpu.memory_space<vmem>>, vector<16x128xbf16>
    tpu.vector_store %arg11[%c0_23, %c384], %56 {strides = array<i32>} : memref<16x512xbf16, #tpu.memory_space<vmem>>, vector<16x128xbf16>,
    %c0_24 = arith.constant 0 : index
    %c0_25 = arith.constant 0 : index
    %58 = vector.load %arg11[%c0_24, %c0_25] : memref<16x512xbf16, #tpu.memory_space<vmem>>, vector<16x512xbf16>
    %c0_26 = arith.constant 0 : index
    %c0_27 = arith.constant 0 : index
    %59 = vector.load %arg8[%c0_26, %c0_27] : memref<512x128xbf16, #tpu.memory_space<vmem>>, vector<512x128xbf16>
    %cst_28 = arith.constant dense<0.000000e+00> : vector<16x128xf32>
    %60 = tpu.matmul %58, %59, %cst_28 {dimension_numbers = #tpu.dot_dimension_numbers<[1], [0], [0], [1], [0, 0, 1, 1], [], []>} : vector<16x512xbf16>, vector<512x128xbf16>, vector<16x128xf32> -> vector<16x128xf32>
    %c0_29 = arith.constant 0 : index
    %c0_30 = arith.constant 0 : index
    %61 = vector.load %arg9[%c0_29, %c0_30] : memref<4x128xf32, #tpu.memory_space<vmem>>, vector<4x128xf32>
    %62 = vector.extract_strided_slice %61 {offsets = [2, 0], sizes = [1, 128], strides = [1, 1]} : vector<4x128xf32> to vector<1x128xf32>
    %63 = vector.extract_strided_slice %61 {offsets = [0, 0], sizes = [1, 128], strides = [1, 1]} : vector<4x128xf32> to vector<1x128xf32>
    %64 = vector.broadcast %63 : vector<1x128xf32> to vector<16x128xf32>
    %65 = arith.mulf %64, %60 : vector<16x128xf32>
    %66 = vector.extract_strided_slice %61 {offsets = [1, 0], sizes = [1, 128], strides = [1, 1]} : vector<4x128xf32> to vector<1x128xf32>
    %67 = vector.broadcast %66 : vector<1x128xf32> to vector<16x128xf32>
    %68 = arith.addf %65, %67 : vector<16x128xf32>
    %69 = math.tanh %68 : vector<16x128xf32>
    %70 = vector.broadcast %62 : vector<1x128xf32> to vector<16x128xf32>
    %71 = arith.mulf %70, %69 : vector<16x128xf32>
    %72 = vector.extract_strided_slice %61 {offsets = [3, 0], sizes = [1, 128], strides = [1, 1]} : vector<4x128xf32> to vector<1x128xf32>
    %73 = vector.broadcast %72 : vector<1x128xf32> to vector<16x128xf32>
    %74 = arith.addf %71, %73 : vector<16x128xf32>
    %c0_31 = arith.constant 0 : index
    %c0_32 = arith.constant 0 : index
    %75 = vector.load %arg10[%c0_31, %c0_32] : memref<16x128xf32, #tpu.memory_space<vmem>>, vector<16x128xf32>
    tpu.vector_store %arg10[%c0_31, %c0_32], %74 {strides = array<i32>} : memref<16x128xf32, #tpu.memory_space<vmem>>, vector<16x128xf32>,
    return
  }
  func.func @transform_0(%arg0: i32) -> (i32, i32) {
    %c0_i32 = arith.constant 0 : i32
    %c0_i32_0 = arith.constant 0 : i32
    return %arg0, %c0_i32 : i32, i32
  }
  func.func @transform_1(%arg0: i32) -> (i32, i32) {
    %c0_i32 = arith.constant 0 : i32
    %c0_i32_0 = arith.constant 0 : i32
    %c0_i32_1 = arith.constant 0 : i32
    return %c0_i32, %c0_i32_0 : i32, i32
  }
  func.func @transform_2(%arg0: i32) -> (i32, i32) {
    %c0_i32 = arith.constant 0 : i32
    %c0_i32_0 = arith.constant 0 : i32
    %c0_i32_1 = arith.constant 0 : i32
    return %c0_i32, %c0_i32_0 : i32, i32
  }
  func.func @transform_3(%arg0: i32) -> (i32, i32) {
    %c0_i32 = arith.constant 0 : i32
    %c0_i32_0 = arith.constant 0 : i32
    %c0_i32_1 = arith.constant 0 : i32
    return %c0_i32, %c0_i32_0 : i32, i32
  }
  func.func @transform_4(%arg0: i32) -> (i32, i32) {
    %c0_i32 = arith.constant 0 : i32
    %c0_i32_0 = arith.constant 0 : i32
    %c0_i32_1 = arith.constant 0 : i32
    return %c0_i32, %c0_i32_0 : i32, i32
  }
  func.func @transform_5(%arg0: i32) -> (i32, i32) {
    %c0_i32 = arith.constant 0 : i32
    %c0_i32_0 = arith.constant 0 : i32
    %c0_i32_1 = arith.constant 0 : i32
    return %c0_i32, %c0_i32_0 : i32, i32
  }
  func.func @transform_6(%arg0: i32) -> (i32, i32) {
    %c0_i32 = arith.constant 0 : i32
    %c0_i32_0 = arith.constant 0 : i32
    %c0_i32_1 = arith.constant 0 : i32
    return %c0_i32, %c0_i32_0 : i32, i32
  }
  func.func @transform_7(%arg0: i32) -> (i32, i32) {
    %c0_i32 = arith.constant 0 : i32
    %c0_i32_0 = arith.constant 0 : i32
    %c0_i32_1 = arith.constant 0 : i32
    return %c0_i32, %c0_i32_0 : i32, i32
  }
  func.func @transform_8(%arg0: i32) -> (i32, i32) {
    %c0_i32 = arith.constant 0 : i32
    %c0_i32_0 = arith.constant 0 : i32
    %c0_i32_1 = arith.constant 0 : i32
    return %c0_i32, %c0_i32_0 : i32, i32
  }
  func.func @transform_9(%arg0: i32) -> (i32, i32) {
    %c0_i32 = arith.constant 0 : i32
    %c0_i32_0 = arith.constant 0 : i32
    return %arg0, %c0_i32 : i32, i32
  }
}

module attributes {stable_mosaic.version = 11 : i64} {
  func.func @mlp_kernel(%arg0: i32, %arg1: memref<16x128xbf16, #tpu.memory_space<vmem>>, %arg2: memref<128x128xbf16, #tpu.memory_space<vmem>>, %arg3: memref<4x128xf32, #tpu.memory_space<vmem>>, %arg4: memref<256x128xbf16, #tpu.memory_space<vmem>>, %arg5: memref<4x128xf32, #tpu.memory_space<vmem>>, %arg6: memref<384x128xbf16, #tpu.memory_space<vmem>>, %arg7: memref<4x128xf32, #tpu.memory_space<vmem>>, %arg8: memref<512x128xbf16, #tpu.memory_space<vmem>>, %arg9: memref<4x128xf32, #tpu.memory_space<vmem>>, %arg10: memref<16x128xf32, #tpu.memory_space<vmem>>, %arg11: memref<16x512xbf16, #tpu.memory_space<vmem>>) attributes {dimension_semantics = [#tpu.dimension_semantics<parallel>], iteration_bounds = array<i64: 1>, scalar_prefetch = 0 : i64, scratch_operands = 1 : i64, tpu.core_type = #tpu.core_type<tc>, window_params = [{transform_indices = @transform_0, window_bounds = array<i64: 16, 128>}, {pipeline_mode = #tpu.pipeline_mode<synchronous>, transform_indices = @transform_1, window_bounds = array<i64: 128, 128>}, {pipeline_mode = #tpu.pipeline_mode<synchronous>, transform_indices = @transform_2, window_bounds = array<i64: 4, 128>}, {pipeline_mode = #tpu.pipeline_mode<synchronous>, transform_indices = @transform_3, window_bounds = array<i64: 256, 128>}, {pipeline_mode = #tpu.pipeline_mode<synchronous>, transform_indices = @transform_4, window_bounds = array<i64: 4, 128>}, {pipeline_mode = #tpu.pipeline_mode<synchronous>, transform_indices = @transform_5, window_bounds = array<i64: 384, 128>}, {pipeline_mode = #tpu.pipeline_mode<synchronous>, transform_indices = @transform_6, window_bounds = array<i64: 4, 128>}, {pipeline_mode = #tpu.pipeline_mode<synchronous>, transform_indices = @transform_7, window_bounds = array<i64: 512, 128>}, {pipeline_mode = #tpu.pipeline_mode<synchronous>, transform_indices = @transform_8, window_bounds = array<i64: 4, 128>}, {transform_indices = @transform_9, window_bounds = array<i64: 16, 128>}]} {
    %c0 = arith.constant 0 : index
    %c0_0 = arith.constant 0 : index
    %0 = vector.load %arg1[%c0, %c0_0] : memref<16x128xbf16, #tpu.memory_space<vmem>>, vector<16x128xbf16>
    %c0_1 = arith.constant 0 : index
    %c0_2 = arith.constant 0 : index
    %1 = vector.load %arg11[%c0_1, %c0_2] : memref<16x512xbf16, #tpu.memory_space<vmem>>, vector<16x128xbf16>
    tpu.vector_store %arg11[%c0_1, %c0_2], %0 {strides = array<i32>} : memref<16x512xbf16, #tpu.memory_space<vmem>>, vector<16x128xbf16>,
    %c0_3 = arith.constant 0 : index
    %c0_4 = arith.constant 0 : index
    %2 = vector.load %arg2[%c0_3, %c0_4] : memref<128x128xbf16, #tpu.memory_space<vmem>>, vector<128x128xbf16>
    %cst = arith.constant dense<0.000000e+00> : vector<16x128xf32>
    %3 = tpu.matmul %0, %2, %cst {dimension_numbers = #tpu.dot_dimension_numbers<[1], [0], [0], [1], [0, 0, 1, 1], [], []>} : vector<16x128xbf16>, vector<128x128xbf16>, vector<16x128xf32> -> vector<16x128xf32>
    %c0_5 = arith.constant 0 : index
    %c0_6 = arith.constant 0 : index
    %4 = vector.load %arg3[%c0_5, %c0_6] : memref<4x128xf32, #tpu.memory_space<vmem>>, vector<4x128xf32>
    %5 = vector.extract_strided_slice %4 {offsets = [2, 0], sizes = [1, 128], strides = [1, 1]} : vector<4x128xf32> to vector<1x128xf32>
    %6 = vector.extract_strided_slice %4 {offsets = [0, 0], sizes = [1, 128], strides = [1, 1]} : vector<4x128xf32> to vector<1x128xf32>
    %7 = vector.broadcast %6 : vector<1x128xf32> to vector<16x128xf32>
    %8 = arith.mulf %7, %3 : vector<16x128xf32>
    %9 = vector.extract_strided_slice %4 {offsets = [1, 0], sizes = [1, 128], strides = [1, 1]} : vector<4x128xf32> to vector<1x128xf32>
    %10 = vector.broadcast %9 : vector<1x128xf32> to vector<16x128xf32>
    %11 = arith.addf %8, %10 : vector<16x128xf32>
    %12 = math.tanh %11 : vector<16x128xf32>
    %13 = vector.broadcast %5 : vector<1x128xf32> to vector<16x128xf32>
    %14 = arith.mulf %13, %12 : vector<16x128xf32>
    %15 = vector.extract_strided_slice %4 {offsets = [3, 0], sizes = [1, 128], strides = [1, 1]} : vector<4x128xf32> to vector<1x128xf32>
    %16 = vector.broadcast %15 : vector<1x128xf32> to vector<16x128xf32>
    %17 = arith.addf %14, %16 : vector<16x128xf32>
    %18 = arith.truncf %17 : vector<16x128xf32> to vector<16x128xbf16>
    %c0_7 = arith.constant 0 : index
    %c128 = arith.constant 128 : index
    %19 = vector.load %arg11[%c0_7, %c128] : memref<16x512xbf16, #tpu.memory_space<vmem>>, vector<16x128xbf16>
    tpu.vector_store %arg11[%c0_7, %c128], %18 {strides = array<i32>} : memref<16x512xbf16, #tpu.memory_space<vmem>>, vector<16x128xbf16>,
    %c0_8 = arith.constant 0 : index
    %c0_9 = arith.constant 0 : index
    %20 = vector.load %arg11[%c0_8, %c0_9] : memref<16x512xbf16, #tpu.memory_space<vmem>>, vector<16x256xbf16>
    %c0_10 = arith.constant 0 : index
    %c0_11 = arith.constant 0 : index
    %21 = vector.load %arg4[%c0_10, %c0_11] : memref<256x128xbf16, #tpu.memory_space<vmem>>, vector<256x128xbf16>
    %cst_12 = arith.constant dense<0.000000e+00> : vector<16x128xf32>
    %22 = tpu.matmul %20, %21, %cst_12 {dimension_numbers = #tpu.dot_dimension_numbers<[1], [0], [0], [1], [0, 0, 1, 1], [], []>} : vector<16x256xbf16>, vector<256x128xbf16>, vector<16x128xf32> -> vector<16x128xf32>
    %c0_13 = arith.constant 0 : index
    %c0_14 = arith.constant 0 : index
    %23 = vector.load %arg5[%c0_13, %c0_14] : memref<4x128xf32, #tpu.memory_space<vmem>>, vector<4x128xf32>
    %24 = vector.extract_strided_slice %23 {offsets = [2, 0], sizes = [1, 128], strides = [1, 1]} : vector<4x128xf32> to vector<1x128xf32>
    %25 = vector.extract_strided_slice %23 {offsets = [0, 0], sizes = [1, 128], strides = [1, 1]} : vector<4x128xf32> to vector<1x128xf32>
    %26 = vector.broadcast %25 : vector<1x128xf32> to vector<16x128xf32>
    %27 = arith.mulf %26, %22 : vector<16x128xf32>
    %28 = vector.extract_strided_slice %23 {offsets = [1, 0], sizes = [1, 128], strides = [1, 1]} : vector<4x128xf32> to vector<1x128xf32>
    %29 = vector.broadcast %28 : vector<1x128xf32> to vector<16x128xf32>
    %30 = arith.addf %27, %29 : vector<16x128xf32>
    %31 = math.tanh %30 : vector<16x128xf32>
    %32 = vector.broadcast %24 : vector<1x128xf32> to vector<16x128xf32>
    %33 = arith.mulf %32, %31 : vector<16x128xf32>
    %34 = vector.extract_strided_slice %23 {offsets = [3, 0], sizes = [1, 128], strides = [1, 1]} : vector<4x128xf32> to vector<1x128xf32>
    %35 = vector.broadcast %34 : vector<1x128xf32> to vector<16x128xf32>
    %36 = arith.addf %33, %35 : vector<16x128xf32>
    %37 = arith.truncf %36 : vector<16x128xf32> to vector<16x128xbf16>
    %c0_15 = arith.constant 0 : index
    %c256 = arith.constant 256 : index
    %38 = vector.load %arg11[%c0_15, %c256] : memref<16x512xbf16, #tpu.memory_space<vmem>>, vector<16x128xbf16>
    tpu.vector_store %arg11[%c0_15, %c256], %37 {strides = array<i32>} : memref<16x512xbf16, #tpu.memory_space<vmem>>, vector<16x128xbf16>,
    %c0_16 = arith.constant 0 : index
    %c0_17 = arith.constant 0 : index
    %39 = vector.load %arg11[%c0_16, %c0_17] : memref<16x512xbf16, #tpu.memory_space<vmem>>, vector<16x384xbf16>
    %c0_18 = arith.constant 0 : index
    %c0_19 = arith.constant 0 : index
    %40 = vector.load %arg6[%c0_18, %c0_19] : memref<384x128xbf16, #tpu.memory_space<vmem>>, vector<384x128xbf16>
    %cst_20 = arith.constant dense<0.000000e+00> : vector<16x128xf32>
    %41 = tpu.matmul %39, %40, %cst_20 {dimension_numbers = #tpu.dot_dimension_numbers<[1], [0], [0], [1], [0, 0, 1, 1], [], []>} : vector<16x384xbf16>, vector<384x128xbf16>, vector<16x128xf32> -> vector<16x128xf32>
    %c0_21 = arith.constant 0 : index
    %c0_22 = arith.constant 0 : index
    %42 = vector.load %arg7[%c0_21, %c0_22] : memref<4x128xf32, #tpu.memory_space<vmem>>, vector<4x128xf32>
    %43 = vector.extract_strided_slice %42 {offsets = [2, 0], sizes = [1, 128], strides = [1, 1]} : vector<4x128xf32> to vector<1x128xf32>
    %44 = vector.extract_strided_slice %42 {offsets = [0, 0], sizes = [1, 128], strides = [1, 1]} : vector<4x128xf32> to vector<1x128xf32>
    %45 = vector.broadcast %44 : vector<1x128xf32> to vector<16x128xf32>
    %46 = arith.mulf %45, %41 : vector<16x128xf32>
    %47 = vector.extract_strided_slice %42 {offsets = [1, 0], sizes = [1, 128], strides = [1, 1]} : vector<4x128xf32> to vector<1x128xf32>
    %48 = vector.broadcast %47 : vector<1x128xf32> to vector<16x128xf32>
    %49 = arith.addf %46, %48 : vector<16x128xf32>
    %50 = math.tanh %49 : vector<16x128xf32>
    %51 = vector.broadcast %43 : vector<1x128xf32> to vector<16x128xf32>
    %52 = arith.mulf %51, %50 : vector<16x128xf32>
    %53 = vector.extract_strided_slice %42 {offsets = [3, 0], sizes = [1, 128], strides = [1, 1]} : vector<4x128xf32> to vector<1x128xf32>
    %54 = vector.broadcast %53 : vector<1x128xf32> to vector<16x128xf32>
    %55 = arith.addf %52, %54 : vector<16x128xf32>
    %56 = arith.truncf %55 : vector<16x128xf32> to vector<16x128xbf16>
    %c0_23 = arith.constant 0 : index
    %c384 = arith.constant 384 : index
    %57 = vector.load %arg11[%c0_23, %c384] : memref<16x512xbf16, #tpu.memory_space<vmem>>, vector<16x128xbf16>
    tpu.vector_store %arg11[%c0_23, %c384], %56 {strides = array<i32>} : memref<16x512xbf16, #tpu.memory_space<vmem>>, vector<16x128xbf16>,
    %c0_24 = arith.constant 0 : index
    %c0_25 = arith.constant 0 : index
    %58 = vector.load %arg11[%c0_24, %c0_25] : memref<16x512xbf16, #tpu.memory_space<vmem>>, vector<16x512xbf16>
    %c0_26 = arith.constant 0 : index
    %c0_27 = arith.constant 0 : index
    %59 = vector.load %arg8[%c0_26, %c0_27] : memref<512x128xbf16, #tpu.memory_space<vmem>>, vector<512x128xbf16>
    %cst_28 = arith.constant dense<0.000000e+00> : vector<16x128xf32>
    %60 = tpu.matmul %58, %59, %cst_28 {dimension_numbers = #tpu.dot_dimension_numbers<[1], [0], [0], [1], [0, 0, 1, 1], [], []>} : vector<16x512xbf16>, vector<512x128xbf16>, vector<16x128xf32> -> vector<16x128xf32>
    %c0_29 = arith.constant 0 : index
    %c0_30 = arith.constant 0 : index
    %61 = vector.load %arg9[%c0_29, %c0_30] : memref<4x128xf32, #tpu.memory_space<vmem>>, vector<4x128xf32>
    %62 = vector.extract_strided_slice %61 {offsets = [2, 0], sizes = [1, 128], strides = [1, 1]} : vector<4x128xf32> to vector<1x128xf32>
    %63 = vector.extract_strided_slice %61 {offsets = [0, 0], sizes = [1, 128], strides = [1, 1]} : vector<4x128xf32> to vector<1x128xf32>
    %64 = vector.broadcast %63 : vector<1x128xf32> to vector<16x128xf32>
    %65 = arith.mulf %64, %60 : vector<16x128xf32>
    %66 = vector.extract_strided_slice %61 {offsets = [1, 0], sizes = [1, 128], strides = [1, 1]} : vector<4x128xf32> to vector<1x128xf32>
    %67 = vector.broadcast %66 : vector<1x128xf32> to vector<16x128xf32>
    %68 = arith.addf %65, %67 : vector<16x128xf32>
    %69 = math.tanh %68 : vector<16x128xf32>
    %70 = vector.broadcast %62 : vector<1x128xf32> to vector<16x128xf32>
    %71 = arith.mulf %70, %69 : vector<16x128xf32>
    %72 = vector.extract_strided_slice %61 {offsets = [3, 0], sizes = [1, 128], strides = [1, 1]} : vector<4x128xf32> to vector<1x128xf32>
    %73 = vector.broadcast %72 : vector<1x128xf32> to vector<16x128xf32>
    %74 = arith.addf %71, %73 : vector<16x128xf32>
    %c0_31 = arith.constant 0 : index
    %c0_32 = arith.constant 0 : index
    %75 = vector.load %arg10[%c0_31, %c0_32] : memref<16x128xf32, #tpu.memory_space<vmem>>, vector<16x128xf32>
    tpu.vector_store %arg10[%c0_31, %c0_32], %74 {strides = array<i32>} : memref<16x128xf32, #tpu.memory_space<vmem>>, vector<16x128xf32>,
    return
  }
  func.func @transform_0(%arg0: i32) -> (i32, i32) {
    %c0_i32 = arith.constant 0 : i32
    %c0_i32_0 = arith.constant 0 : i32
    return %arg0, %c0_i32 : i32, i32
  }
  func.func @transform_1(%arg0: i32) -> (i32, i32) {
    %c0_i32 = arith.constant 0 : i32
    %c0_i32_0 = arith.constant 0 : i32
    %c0_i32_1 = arith.constant 0 : i32
    return %c0_i32, %c0_i32_0 : i32, i32
  }
  func.func @transform_2(%arg0: i32) -> (i32, i32) {
    %c0_i32 = arith.constant 0 : i32
    %c0_i32_0 = arith.constant 0 : i32
    %c0_i32_1 = arith.constant 0 : i32
    return %c0_i32, %c0_i32_0 : i32, i32
  }
  func.func @transform_3(%arg0: i32) -> (i32, i32) {
    %c0_i32 = arith.constant 0 : i32
    %c0_i32_0 = arith.constant 0 : i32
    %c0_i32_1 = arith.constant 0 : i32
    return %c0_i32, %c0_i32_0 : i32, i32
  }
  func.func @transform_4(%arg0: i32) -> (i32, i32) {
    %c0_i32 = arith.constant 0 : i32
    %c0_i32_0 = arith.constant 0 : i32
    %c0_i32_1 = arith.constant 0 : i32
    return %c0_i32, %c0_i32_0 : i32, i32
  }
  func.func @transform_5(%arg0: i32) -> (i32, i32) {
    %c0_i32 = arith.constant 0 : i32
    %c0_i32_0 = arith.constant 0 : i32
    %c0_i32_1 = arith.constant 0 : i32
    return %c0_i32, %c0_i32_0 : i32, i32
  }
  func.func @transform_6(%arg0: i32) -> (i32, i32) {
    %c0_i32 = arith.constant 0 : i32
    %c0_i32_0 = arith.constant 0 : i32
    %c0_i32_1 = arith.constant 0 : i32
    return %c0_i32, %c0_i32_0 : i32, i32
  }
  func.func @transform_7(%arg0: i32) -> (i32, i32) {
    %c0_i32 = arith.constant 0 : i32
    %c0_i32_0 = arith.constant 0 : i32
    %c0_i32_1 = arith.constant 0 : i32
    return %c0_i32, %c0_i32_0 : i32, i32
  }
  func.func @transform_8(%arg0: i32) -> (i32, i32) {
    %c0_i32 = arith.constant 0 : i32
    %c0_i32_0 = arith.constant 0 : i32
    %c0_i32_1 = arith.constant 0 : i32
    return %c0_i32, %c0_i32_0 : i32, i32
  }
  func.func @transform_9(%arg0: i32) -> (i32, i32) {
    %c0_i32 = arith.constant 0 : i32
    %c0_i32_0 = arith.constant 0 : i32
    return %arg0, %c0_i32 : i32, i32
  }
}

</mosaic_0001>

<llo_original>
// kernel: tpu_custom_call.1
$region0: #{tpu_custom_call.1}
  #allocation0 [shape = 'u32[]', space=smem, size = 0x4, offset = 0x4, fixed_abs, tag = 'smem constant byte address 0x4 - core index']
  #allocation1 [shape = 'u32[144,128]{1,0:T(1,128)}', space=vmem, size = 0x12000, scoped, tag = 'internal scratch']
  #allocation2 [shape = 'bf16[16,512]{1,0:T(16,128)(2,1)}', space=vmem, size = 0x4000, scoped, tag = 'scratch operand']
  %s0 = inlined_call_operand.hbm [shape: bf16[16,128], index: 0, kind: input, shape index: {}]
  %s1 = inlined_call_operand.hbm [shape: bf16[128,128], index: 1, kind: input, shape index: {}]
  %s2 = inlined_call_operand.vmem [shape: f32[4,128], index: 2, kind: input, shape index: {}]
  %s3 = inlined_call_operand.hbm [shape: bf16[256,128], index: 3, kind: input, shape index: {}]
  %s4 = inlined_call_operand.vmem [shape: f32[4,128], index: 4, kind: input, shape index: {}]
  %s5 = inlined_call_operand.hbm [shape: bf16[384,128], index: 5, kind: input, shape index: {}]
  %s6 = inlined_call_operand.vmem [shape: f32[4,128], index: 6, kind: input, shape index: {}]
  %s7 = inlined_call_operand.hbm [shape: bf16[512,128], index: 7, kind: input, shape index: {}]
  %s8 = inlined_call_operand.vmem [shape: f32[4,128], index: 8, kind: input, shape index: {}]
  %s9 = inlined_call_operand.hbm [shape: f32[16,128], index: 9, kind: output, shape index: {}]
  %s10 = sld [smem:[#allocation0]]
  $region66: #{tpu_custom_call.1} parent=0
    _
  %s12 = ssub.s32 1, %s10
  %s13 = scalar_select 0, %s12, %s10
  $region1: #{tpu_custom_call.1} parent=0
    #allocation3 [shape = 'u8[4096]{0}', space=vmem, size = 0x1000, scoped, tag = 'input window, operand 0, single buffered']
    #allocation4 [shape = 's32[1]{0}', space=sflag, size = 0x4, scoped, tag = 'scoped memory for tpu_custom_call.1']
    #allocation5 [shape = 's32[1]{0}', space=sflag, size = 0x4, scoped, tag = 'scoped memory for tpu_custom_call.1']
    #allocation6 [shape = 'u8[32768]{0}', space=vmem, size = 0x8000, scoped, tag = 'input window, operand 1, single buffered']
    #allocation7 [shape = 's32[1]{0}', space=sflag, size = 0x4, scoped, tag = 'scoped memory for tpu_custom_call.1']
    #allocation8 [shape = 'u8[65536]{0}', space=vmem, size = 0x10000, scoped, tag = 'input window, operand 3, single buffered']
    #allocation9 [shape = 'u8[98304]{0}', space=vmem, size = 0x18000, scoped, tag = 'input window, operand 5, single buffered']
    #allocation10 [shape = 's32[1]{0}', space=sflag, size = 0x4, scoped, tag = 'scoped memory for tpu_custom_call.1']
    #allocation11 [shape = 'u8[131072]{0}', space=vmem, size = 0x20000, scoped, tag = 'input window, operand 7, single buffered']
    #allocation12 [shape = 'u8[8192]{0}', space=vmem, size = 0x2000, scoped, tag = 'output window, operand 0, single buffered']
    %14 = vsyncpa [#allocation4], 0
    %15 = vsyncpa [#allocation7], 0
    %16 = vsyncpa [#allocation10], 0
    %17 = vsyncpa [#allocation5], 0
    // Predicated region
    $region2: #{tpu_custom_call.1} parent=1 // pred_check
      _
    $region3: #{tpu_custom_call.1} parent=1 // pred_check_branch
      %19 = sbr.rel (0) target = $region5
    $region4: #{tpu_custom_call.1} parent=1 // pred_region
      %s21 = ssub.s32 128, 128
      %22 = vsyncadd [#allocation4], %s21
      %s23 = sshll.u32 [#allocation3], 4
      %s24 = int_to_ptr.vmem [resolvable:$true] %s23
      %29 = dma.hbm_to_vmem [thread:$0]  %s0, 128, %s24, [#allocation4], 64, 64, 4
    $region5: #{tpu_custom_call.1} parent=1 // pred_fallthru
      _
    // Predicated region
    $region6: #{tpu_custom_call.1} parent=1 // pred_check
      _
    $region7: #{tpu_custom_call.1} parent=1 // pred_check_branch
      %31 = sbr.rel (0) target = $region9
    $region8: #{tpu_custom_call.1} parent=1 // pred_region
      %s33 = ssub.s32 1024, 1024
      %34 = vsyncadd [#allocation7], %s33
      %s35 = sshll.u32 [#allocation6], 4
      %s36 = int_to_ptr.vmem [resolvable:$true] %s35
      %41 = dma.hbm_to_vmem [thread:$0]  %s1, 1024, %s36, [#allocation7], 64, 64, 4
    $region9: #{tpu_custom_call.1} parent=1 // pred_fallthru
      _
    // Predicated region
    $region10: #{tpu_custom_call.1} parent=1 // pred_check
      _
    $region11: #{tpu_custom_call.1} parent=1 // pred_check_branch
      %43 = sbr.rel (0) target = $region13
    $region12: #{tpu_custom_call.1} parent=1 // pred_region
      _
    $region13: #{tpu_custom_call.1} parent=1 // pred_fallthru
      _
    // Predicated region
    $region14: #{tpu_custom_call.1} parent=1 // pred_check
      _
    $region15: #{tpu_custom_call.1} parent=1 // pred_check_branch
      %45 = sbr.rel (0) target = $region17
    $region16: #{tpu_custom_call.1} parent=1 // pred_region
      %s47 = ssub.s32 2048, 2048
      %48 = vsyncadd [#allocation7], %s47
      %s49 = sshll.u32 [#allocation8], 4
      %s50 = int_to_ptr.vmem [resolvable:$true] %s49
      %55 = dma.hbm_to_vmem [thread:$0]  %s3, 2048, %s50, [#allocation7], 64, 64, 4
    $region17: #{tpu_custom_call.1} parent=1 // pred_fallthru
      _
    // Predicated region
    $region18: #{tpu_custom_call.1} parent=1 // pred_check
      _
    $region19: #{tpu_custom_call.1} parent=1 // pred_check_branch
      %57 = sbr.rel (0) target = $region21
    $region20: #{tpu_custom_call.1} parent=1 // pred_region
      _
    $region21: #{tpu_custom_call.1} parent=1 // pred_fallthru
      _
    // Predicated region
    $region22: #{tpu_custom_call.1} parent=1 // pred_check
      _
    $region23: #{tpu_custom_call.1} parent=1 // pred_check_branch
      %59 = sbr.rel (0) target = $region25
    $region24: #{tpu_custom_call.1} parent=1 // pred_region
      %s61 = ssub.s32 3072, 3072
      %62 = vsyncadd [#allocation10], %s61
      %s63 = sshll.u32 [#allocation9], 4
      %s64 = int_to_ptr.vmem [resolvable:$true] %s63
      %69 = dma.hbm_to_vmem [thread:$0]  %s5, 3072, %s64, [#allocation10], 64, 64, 4
    $region25: #{tpu_custom_call.1} parent=1 // pred_fallthru
      _
    // Predicated region
    $region26: #{tpu_custom_call.1} parent=1 // pred_check
      _
    $region27: #{tpu_custom_call.1} parent=1 // pred_check_branch
      %71 = sbr.rel (0) target = $region29
    $region28: #{tpu_custom_call.1} parent=1 // pred_region
      _
    $region29: #{tpu_custom_call.1} parent=1 // pred_fallthru
      _
    // Predicated region
    $region30: #{tpu_custom_call.1} parent=1 // pred_check
      _
    $region31: #{tpu_custom_call.1} parent=1 // pred_check_branch
      %73 = sbr.rel (0) target = $region33
    $region32: #{tpu_custom_call.1} parent=1 // pred_region
      %s75 = ssub.s32 4096, 4096
      %76 = vsyncadd [#allocation10], %s75
      %s77 = sshll.u32 [#allocation11], 4
      %s78 = int_to_ptr.vmem [resolvable:$true] %s77
      %83 = dma.hbm_to_vmem [thread:$0]  %s7, 4096, %s78, [#allocation10], 64, 64, 4
    $region33: #{tpu_custom_call.1} parent=1 // pred_fallthru
      _
    // Predicated region
    $region34: #{tpu_custom_call.1} parent=1 // pred_check
      _
    $region35: #{tpu_custom_call.1} parent=1 // pred_check_branch
      %85 = sbr.rel (0) target = $region37
    $region36: #{tpu_custom_call.1} parent=1 // pred_region
      _
    $region37: #{tpu_custom_call.1} parent=1 // pred_fallthru
      _
    // Predicated region
    $region38: #{tpu_custom_call.1} parent=1 // pred_check
      _
    $region39: #{tpu_custom_call.1} parent=1 // pred_check_branch
      %87 = sbr.rel (0) target = $region41
    $region40: #{tpu_custom_call.1} parent=1 // pred_region
      %88 = dma.done [#allocation4], 128
    $region41: #{tpu_custom_call.1} parent=1 // pred_fallthru
      _
    // Predicated region
    $region42: #{tpu_custom_call.1} parent=1 // pred_check
      _
    $region43: #{tpu_custom_call.1} parent=1 // pred_check_branch
      %90 = sbr.rel (0) target = $region45
    $region44: #{tpu_custom_call.1} parent=1 // pred_region
      %91 = dma.done [#allocation7], 1024
    $region45: #{tpu_custom_call.1} parent=1 // pred_fallthru
      _
    // Predicated region
    $region46: #{tpu_custom_call.1} parent=1 // pred_check
      _
    $region47: #{tpu_custom_call.1} parent=1 // pred_check_branch
      %93 = sbr.rel (0) target = $region49
    $region48: #{tpu_custom_call.1} parent=1 // pred_region
      %94 = dma.done [#allocation7], 2048
    $region49: #{tpu_custom_call.1} parent=1 // pred_fallthru
      _
    // Predicated region
    $region50: #{tpu_custom_call.1} parent=1 // pred_check
      _
    $region51: #{tpu_custom_call.1} parent=1 // pred_check_branch
      %96 = sbr.rel (0) target = $region53
    $region52: #{tpu_custom_call.1} parent=1 // pred_region
      %97 = dma.done [#allocation10], 3072
    $region53: #{tpu_custom_call.1} parent=1 // pred_fallthru
      _
    // Predicated region
    $region54: #{tpu_custom_call.1} parent=1 // pred_check
      _
    $region55: #{tpu_custom_call.1} parent=1 // pred_check_branch
      %99 = sbr.rel (0) target = $region57
    $region56: #{tpu_custom_call.1} parent=1 // pred_region
      %100 = dma.done [#allocation10], 4096
    $region57: #{tpu_custom_call.1} parent=1 // pred_fallthru
      _
    %v102 = vld [vmem:[#allocation3] sm:$0xf]
    %v103 = vld [vmem:[#allocation3 + $0x4] sm:$0xf]
    %v106 = vunpack.c.l.b16 %v102
    %v107 = vunpack.c.l.b16 %v103
    %v108 = vpack.c.b16 %v107, %v106
    %110 = vst [vmem:[#allocation2] sm:$0xff] %v108
    %v111 = vld [vmem:[#allocation6] sm:$0xf]
    %v112 = vld [vmem:[#allocation6 + $0x4] sm:$0xf]
    %v113 = vld [vmem:[#allocation6 + $0x8] sm:$0xf]
    %v114 = vld [vmem:[#allocation6 + $0xc] sm:$0xf]
    %v115 = vld [vmem:[#allocation6 + $0x10] sm:$0xf]
    %v116 = vld [vmem:[#allocation6 + $0x14] sm:$0xf]
    %v117 = vld [vmem:[#allocation6 + $0x18] sm:$0xf]
    %v118 = vld [vmem:[#allocation6 + $0x1c] sm:$0xf]
    %v119 = vld [vmem:[#allocation6 + $0x20] sm:$0xf]
    %v120 = vld [vmem:[#allocation6 + $0x24] sm:$0xf]
    %v121 = vld [vmem:[#allocation6 + $0x28] sm:$0xf]
    %v122 = vld [vmem:[#allocation6 + $0x2c] sm:$0xf]
    %v123 = vld [vmem:[#allocation6 + $0x30] sm:$0xf]
    %v124 = vld [vmem:[#allocation6 + $0x34] sm:$0xf]
    %v125 = vld [vmem:[#allocation6 + $0x38] sm:$0xf]
    %v126 = vld [vmem:[#allocation6 + $0x3c] sm:$0xf]
    %v143 = vunpack.c.l.b16 %v111
    %v144 = vunpack.c.l.b16 %v112
    %v145 = vunpack.c.l.b16 %v113
    %v146 = vunpack.c.l.b16 %v114
    %v147 = vunpack.c.l.b16 %v115
    %v148 = vunpack.c.l.b16 %v116
    %v149 = vunpack.c.l.b16 %v117
    %v150 = vunpack.c.l.b16 %v118
    %v151 = vunpack.c.l.b16 %v119
    %v152 = vunpack.c.l.b16 %v120
    %v153 = vunpack.c.l.b16 %v121
    %v154 = vunpack.c.l.b16 %v122
    %v155 = vunpack.c.l.b16 %v123
    %v156 = vunpack.c.l.b16 %v124
    %v157 = vunpack.c.l.b16 %v125
    %v158 = vunpack.c.l.b16 %v126
    %v159 = vpack.c.b16 %v144, %v143
    %v160 = vpack.c.b16 %v146, %v145
    %v161 = vpack.c.b16 %v148, %v147
    %v162 = vpack.c.b16 %v150, %v149
    %v163 = vpack.c.b16 %v152, %v151
    %v164 = vpack.c.b16 %v154, %v153
    %v165 = vpack.c.b16 %v156, %v155
    %v166 = vpack.c.b16 %v158, %v157
    %175 = vmatprep.subr.bf16.mxu0 0
    %176 = vmatpush1.bf16.msra.mxu0 %v159
    %177 = vmatprep.subr.bf16.mxu0 0
    %178 = vmatpush1.bf16.msra.mxu0 %v160
    %179 = vmatprep.subr.bf16.mxu0 0
    %180 = vmatpush1.bf16.msra.mxu0 %v161
    %181 = vmatprep.subr.bf16.mxu0 0
    %182 = vmatpush1.bf16.msra.mxu0 %v162
    %183 = vmatprep.subr.bf16.mxu0 0
    %184 = vmatpush1.bf16.msra.mxu0 %v163
    %185 = vmatprep.subr.bf16.mxu0 0
    %186 = vmatpush1.bf16.msra.mxu0 %v164
    %187 = vmatprep.subr.bf16.mxu0 0
    %188 = vmatpush1.bf16.msra.mxu0 %v165
    %189 = vmatprep.subr.bf16.mxu0 0
    %190 = vmatpush1.bf16.msra.mxu0 %v166
    %191 = vmatprep.subr.bf16.mxu0 0
    %192 = vmatpush1.bf16.msra.mxu0 0
    %193 = vmatprep.subr.bf16.mxu0 0
    %194 = vmatpush1.bf16.msra.mxu0 0
    %195 = vmatprep.subr.bf16.mxu0 0
    %196 = vmatpush1.bf16.msra.mxu0 0
    %197 = vmatprep.subr.bf16.mxu0 0
    %198 = vmatpush1.bf16.msra.mxu0 0
    %199 = vmatprep.subr.bf16.mxu0 0
    %200 = vmatpush1.bf16.msra.mxu0 0
    %201 = vmatprep.subr.bf16.mxu0 0
    %202 = vmatpush1.bf16.msra.mxu0 0
    %203 = vmatprep.subr.bf16.mxu0 0
    %204 = vmatpush1.bf16.msra.mxu0 0
    %205 = vmatprep.subr.bf16.mxu0 0
    %206 = vmatpush1.bf16.msra.mxu0 0
    %207 = vmatprep.mubr.bf16.mxu0 0
    %208 = vmatmul.mubr.bf16.gmra.mrb[0].mxu0 %v108
    %v209 = vpop.f32.mrb[0].mxu0
    %v210 = vadd.f32 0.0, %v209
    %v211 = vpop.f32.mrb[0].mxu0
    %v212 = vpop.f32.mrb[0].mxu0
    %v213 = vadd.f32 0.0, %v212
    %v214 = vpop.f32.mrb[0].mxu0
    %215 = vdwg.mxu0
    %v216 = vld [vmem:[%s2] sm:$0xf]
    %v217 = vlaneseq
    %v218 = vshrl.u32 %v217, 7
    %v219 = vsub.s32 0, %v218
    %v220 = vrot.slane %v216, %v219
    %v221 = vmul.f32 %v220, %v210
    %v222 = vmul.f32 %v220, %v213
    %v223 = vlaneseq
    %v224 = vshrl.u32 %v223, 7
    %v225 = vsub.s32 1, %v224
    %v226 = vrot.slane %v216, %v225
    %v227 = vadd.f32 %v221, %v226
    %v228 = vadd.f32 %v222, %v226
    %v229 = vtanh.pop %v227
    %v230 = vtanh.pop %v228
    %v231 = vlaneseq
    %v232 = vshrl.u32 %v231, 7
    %v233 = vsub.s32 2, %v232
    %v234 = vrot.slane %v216, %v233
    %v235 = vmul.f32 %v234, %v229
    %v236 = vmul.f32 %v234, %v230
    %v237 = vlaneseq
    %v238 = vshrl.u32 %v237, 7
    %v239 = vsub.s32 3, %v238
    %v240 = vrot.slane %v216, %v239
    %v241 = vadd.f32 %v235, %v240
    %v242 = vadd.f32 %v236, %v240
    %v243 = vpack.c.bf16 %v242, %v241
    %244 = vst [vmem:[#allocation2 + $0x8] sm:$0xff] %v243
    %v245 = vld [vmem:[#allocation2] sm:$0xff]
    %v246 = vld [vmem:[#allocation2 + $0x8] sm:$0xff]
    %v247 = vld [vmem:[#allocation8] sm:$0xf]
    %v248 = vld [vmem:[#allocation8 + $0x4] sm:$0xf]
    %v249 = vld [vmem:[#allocation8 + $0x8] sm:$0xf]
    %v250 = vld [vmem:[#allocation8 + $0xc] sm:$0xf]
    %v251 = vld [vmem:[#allocation8 + $0x10] sm:$0xf]
    %v252 = vld [vmem:[#allocation8 + $0x14] sm:$0xf]
    %v253 = vld [vmem:[#allocation8 + $0x18] sm:$0xf]
    %v254 = vld [vmem:[#allocation8 + $0x1c] sm:$0xf]
    %v255 = vld [vmem:[#allocation8 + $0x20] sm:$0xf]
    %v256 = vld [vmem:[#allocation8 + $0x24] sm:$0xf]
    %v257 = vld [vmem:[#allocation8 + $0x28] sm:$0xf]
    %v258 = vld [vmem:[#allocation8 + $0x2c] sm:$0xf]
    %v259 = vld [vmem:[#allocation8 + $0x30] sm:$0xf]
    %v260 = vld [vmem:[#allocation8 + $0x34] sm:$0xf]
    %v261 = vld [vmem:[#allocation8 + $0x38] sm:$0xf]
    %v262 = vld [vmem:[#allocation8 + $0x3c] sm:$0xf]
    %v263 = vld [vmem:[#allocation8 + $0x40] sm:$0xf]
    %v264 = vld [vmem:[#allocation8 + $0x44] sm:$0xf]
    %v265 = vld [vmem:[#allocation8 + $0x48] sm:$0xf]
    %v266 = vld [vmem:[#allocation8 + $0x4c] sm:$0xf]
    %v267 = vld [vmem:[#allocation8 + $0x50] sm:$0xf]
    %v268 = vld [vmem:[#allocation8 + $0x54] sm:$0xf]
    %v269 = vld [vmem:[#allocation8 + $0x58] sm:$0xf]
    %v270 = vld [vmem:[#allocation8 + $0x5c] sm:$0xf]
    %v271 = vld [vmem:[#allocation8 + $0x60] sm:$0xf]
    %v272 = vld [vmem:[#allocation8 + $0x64] sm:$0xf]
    %v273 = vld [vmem:[#allocation8 + $0x68] sm:$0xf]
    %v274 = vld [vmem:[#allocation8 + $0x6c] sm:$0xf]
    %v275 = vld [vmem:[#allocation8 + $0x70] sm:$0xf]
    %v276 = vld [vmem:[#allocation8 + $0x74] sm:$0xf]
    %v277 = vld [vmem:[#allocation8 + $0x78] sm:$0xf]
    %v278 = vld [vmem:[#allocation8 + $0x7c] sm:$0xf]
    %v311 = vunpack.c.l.b16 %v247
    %v312 = vunpack.c.l.b16 %v248
    %v313 = vunpack.c.l.b16 %v249
    %v314 = vunpack.c.l.b16 %v250
    %v315 = vunpack.c.l.b16 %v251
    %v316 = vunpack.c.l.b16 %v252
    %v317 = vunpack.c.l.b16 %v253
    %v318 = vunpack.c.l.b16 %v254
    %v319 = vunpack.c.l.b16 %v255
    %v320 = vunpack.c.l.b16 %v256
    %v321 = vunpack.c.l.b16 %v257
    %v322 = vunpack.c.l.b16 %v258
    %v323 = vunpack.c.l.b16 %v259
    %v324 = vunpack.c.l.b16 %v260
    %v325 = vunpack.c.l.b16 %v261
    %v326 = vunpack.c.l.b16 %v262
    %v327 = vunpack.c.l.b16 %v263
    %v328 = vunpack.c.l.b16 %v264
    %v329 = vunpack.c.l.b16 %v265
    %v330 = vunpack.c.l.b16 %v266
    %v331 = vunpack.c.l.b16 %v267
    %v332 = vunpack.c.l.b16 %v268
    %v333 = vunpack.c.l.b16 %v269
    %v334 = vunpack.c.l.b16 %v270
    %v335 = vunpack.c.l.b16 %v271
    %v336 = vunpack.c.l.b16 %v272
    %v337 = vunpack.c.l.b16 %v273
    %v338 = vunpack.c.l.b16 %v274
    %v339 = vunpack.c.l.b16 %v275
    %v340 = vunpack.c.l.b16 %v276
    %v341 = vunpack.c.l.b16 %v277
    %v342 = vunpack.c.l.b16 %v278
    %v343 = vpack.c.b16 %v312, %v311
    %v344 = vpack.c.b16 %v314, %v313
    %v345 = vpack.c.b16 %v316, %v315
    %v346 = vpack.c.b16 %v318, %v317
    %v347 = vpack.c.b16 %v320, %v319
    %v348 = vpack.c.b16 %v322, %v321
    %v349 = vpack.c.b16 %v324, %v323
    %v350 = vpack.c.b16 %v326, %v325
    %v351 = vpack.c.b16 %v328, %v327
    %v352 = vpack.c.b16 %v330, %v329
    %v353 = vpack.c.b16 %v332, %v331
    %v354 = vpack.c.b16 %v334, %v333
    %v355 = vpack.c.b16 %v336, %v335
    %v356 = vpack.c.b16 %v338, %v337
    %v357 = vpack.c.b16 %v340, %v339
    %v358 = vpack.c.b16 %v342, %v341
    %375 = vmatprep.subr.bf16.mxu0 0
    %376 = vmatpush1.bf16.msra.mxu0 %v343
    %377 = vmatprep.subr.bf16.mxu0 0
    %378 = vmatpush1.bf16.msra.mxu0 %v344
    %379 = vmatprep.subr.bf16.mxu0 0
    %380 = vmatpush1.bf16.msra.mxu0 %v345
    %381 = vmatprep.subr.bf16.mxu0 0
    %382 = vmatpush1.bf16.msra.mxu0 %v346
    %383 = vmatprep.subr.bf16.mxu0 0
    %384 = vmatpush1.bf16.msra.mxu0 %v347
    %385 = vmatprep.subr.bf16.mxu0 0
    %386 = vmatpush1.bf16.msra.mxu0 %v348
    %387 = vmatprep.subr.bf16.mxu0 0
    %388 = vmatpush1.bf16.msra.mxu0 %v349
    %389 = vmatprep.subr.bf16.mxu0 0
    %390 = vmatpush1.bf16.msra.mxu0 %v350
    %391 = vmatprep.subr.bf16.mxu0 0
    %392 = vmatpush1.bf16.msra.mxu0 %v351
    %393 = vmatprep.subr.bf16.mxu0 0
    %394 = vmatpush1.bf16.msra.mxu0 %v352
    %395 = vmatprep.subr.bf16.mxu0 0
    %396 = vmatpush1.bf16.msra.mxu0 %v353
    %397 = vmatprep.subr.bf16.mxu0 0
    %398 = vmatpush1.bf16.msra.mxu0 %v354
    %399 = vmatprep.subr.bf16.mxu0 0
    %400 = vmatpush1.bf16.msra.mxu0 %v355
    %401 = vmatprep.subr.bf16.mxu0 0
    %402 = vmatpush1.bf16.msra.mxu0 %v356
    %403 = vmatprep.subr.bf16.mxu0 0
    %404 = vmatpush1.bf16.msra.mxu0 %v357
    %405 = vmatprep.subr.bf16.mxu0 0
    %406 = vmatpush1.bf16.msra.mxu0 %v358
    %407 = vmatprep.mubr.bf16.mxu0 %v246
    %408 = vmatmul.mubr.bf16.gmra.mrb[0].mxu0 %v245
    %v409 = vpop.f32.mrb[0].mxu0
    %v410 = vadd.f32 0.0, %v409
    %v411 = vpop.f32.mrb[0].mxu0
    %v412 = vpop.f32.mrb[0].mxu0
    %v413 = vadd.f32 0.0, %v412
    %v414 = vpop.f32.mrb[0].mxu0
    %415 = vdwg.mxu0
    %v416 = vld [vmem:[%s4] sm:$0xf]
    %v417 = vlaneseq
    %v418 = vshrl.u32 %v417, 7
    %v419 = vsub.s32 0, %v418
    %v420 = vrot.slane %v416, %v419
    %v421 = vmul.f32 %v420, %v410
    %v422 = vmul.f32 %v420, %v413
    %v423 = vlaneseq
    %v424 = vshrl.u32 %v423, 7
    %v425 = vsub.s32 1, %v424
    %v426 = vrot.slane %v416, %v425
    %v427 = vadd.f32 %v421, %v426
    %v428 = vadd.f32 %v422, %v426
    %v429 = vtanh.pop %v427
    %v430 = vtanh.pop %v428
    %v431 = vlaneseq
    %v432 = vshrl.u32 %v431, 7
    %v433 = vsub.s32 2, %v432
    %v434 = vrot.slane %v416, %v433
    %v435 = vmul.f32 %v434, %v429
    %v436 = vmul.f32 %v434, %v430
    %v437 = vlaneseq
    %v438 = vshrl.u32 %v437, 7
    %v439 = vsub.s32 3, %v438
    %v440 = vrot.slane %v416, %v439
    %v441 = vadd.f32 %v435, %v440
    %v442 = vadd.f32 %v436, %v440
    %v443 = vpack.c.bf16 %v442, %v441
    %444 = vst [vmem:[#allocation2 + $0x10] sm:$0xff] %v443
    %v445 = vld [vmem:[#allocation2] sm:$0xff]
    %v446 = vld [vmem:[#allocation2 + $0x8] sm:$0xff]
    %v447 = vld [vmem:[#allocation2 + $0x10] sm:$0xff]
    %v448 = vld [vmem:[#allocation9] sm:$0xf]
    %v449 = vld [vmem:[#allocation9 + $0x4] sm:$0xf]
    %v450 = vld [vmem:[#allocation9 + $0x8] sm:$0xf]
    %v451 = vld [vmem:[#allocation9 + $0xc] sm:$0xf]
    %v452 = vld [vmem:[#allocation9 + $0x10] sm:$0xf]
    %v453 = vld [vmem:[#allocation9 + $0x14] sm:$0xf]
    %v454 = vld [vmem:[#allocation9 + $0x18] sm:$0xf]
    %v455 = vld [vmem:[#allocation9 + $0x1c] sm:$0xf]
    %v456 = vld [vmem:[#allocation9 + $0x20] sm:$0xf]
    %v457 = vld [vmem:[#allocation9 + $0x24] sm:$0xf]
    %v458 = vld [vmem:[#allocation9 + $0x28] sm:$0xf]
    %v459 = vld [vmem:[#allocation9 + $0x2c] sm:$0xf]
    %v460 = vld [vmem:[#allocation9 + $0x30] sm:$0xf]
    %v461 = vld [vmem:[#allocation9 + $0x34] sm:$0xf]
    %v462 = vld [vmem:[#allocation9 + $0x38] sm:$0xf]
    %v463 = vld [vmem:[#allocation9 + $0x3c] sm:$0xf]
    %v464 = vld [vmem:[#allocation9 + $0x40] sm:$0xf]
    %v465 = vld [vmem:[#allocation9 + $0x44] sm:$0xf]
    %v466 = vld [vmem:[#allocation9 + $0x48] sm:$0xf]
    %v467 = vld [vmem:[#allocation9 + $0x4c] sm:$0xf]
    %v468 = vld [vmem:[#allocation9 + $0x50] sm:$0xf]
    %v469 = vld [vmem:[#allocation9 + $0x54] sm:$0xf]
    %v470 = vld [vmem:[#allocation9 + $0x58] sm:$0xf]
    %v471 = vld [vmem:[#allocation9 + $0x5c] sm:$0xf]
    %v472 = vld [vmem:[#allocation9 + $0x60] sm:$0xf]
    %v473 = vld [vmem:[#allocation9 + $0x64] sm:$0xf]
    %v474 = vld [vmem:[#allocation9 + $0x68] sm:$0xf]
    %v475 = vld [vmem:[#allocation9 + $0x6c] sm:$0xf]
    %v476 = vld [vmem:[#allocation9 + $0x70] sm:$0xf]
    %v477 = vld [vmem:[#allocation9 + $0x74] sm:$0xf]
    %v478 = vld [vmem:[#allocation9 + $0x78] sm:$0xf]
    %v479 = vld [vmem:[#allocation9 + $0x7c] sm:$0xf]
    %v480 = vld [vmem:[#allocation9 + $0x80] sm:$0xf]
    %v481 = vld [vmem:[#allocation9 + $0x84] sm:$0xf]
    %v482 = vld [vmem:[#allocation9 + $0x88] sm:$0xf]
    %v483 = vld [vmem:[#allocation9 + $0x8c] sm:$0xf]
    %v484 = vld [vmem:[#allocation9 + $0x90] sm:$0xf]
    %v485 = vld [vmem:[#allocation9 + $0x94] sm:$0xf]
    %v486 = vld [vmem:[#allocation9 + $0x98] sm:$0xf]
    %v487 = vld [vmem:[#allocation9 + $0x9c] sm:$0xf]
    %v488 = vld [vmem:[#allocation9 + $0xa0] sm:$0xf]
    %v489 = vld [vmem:[#allocation9 + $0xa4] sm:$0xf]
    %v490 = vld [vmem:[#allocation9 + $0xa8] sm:$0xf]
    %v491 = vld [vmem:[#allocation9 + $0xac] sm:$0xf]
    %v492 = vld [vmem:[#allocation9 + $0xb0] sm:$0xf]
    %v493 = vld [vmem:[#allocation9 + $0xb4] sm:$0xf]
    %v494 = vld [vmem:[#allocation9 + $0xb8] sm:$0xf]
    %v495 = vld [vmem:[#allocation9 + $0xbc] sm:$0xf]
    %v544 = vunpack.c.l.b16 %v448
    %v545 = vunpack.c.l.b16 %v449
    %v546 = vunpack.c.l.b16 %v450
    %v547 = vunpack.c.l.b16 %v451
    %v548 = vunpack.c.l.b16 %v452
    %v549 = vunpack.c.l.b16 %v453
    %v550 = vunpack.c.l.b16 %v454
    %v551 = vunpack.c.l.b16 %v455
    %v552 = vunpack.c.l.b16 %v456
    %v553 = vunpack.c.l.b16 %v457
    %v554 = vunpack.c.l.b16 %v458
    %v555 = vunpack.c.l.b16 %v459
    %v556 = vunpack.c.l.b16 %v460
    %v557 = vunpack.c.l.b16 %v461
    %v558 = vunpack.c.l.b16 %v462
    %v559 = vunpack.c.l.b16 %v463
    %v560 = vunpack.c.l.b16 %v464
    %v561 = vunpack.c.l.b16 %v465
    %v562 = vunpack.c.l.b16 %v466
    %v563 = vunpack.c.l.b16 %v467
    %v564 = vunpack.c.l.b16 %v468
    %v565 = vunpack.c.l.b16 %v469
    %v566 = vunpack.c.l.b16 %v470
    %v567 = vunpack.c.l.b16 %v471
    %v568 = vunpack.c.l.b16 %v472
    %v569 = vunpack.c.l.b16 %v473
    %v570 = vunpack.c.l.b16 %v474
    %v571 = vunpack.c.l.b16 %v475
    %v572 = vunpack.c.l.b16 %v476
    %v573 = vunpack.c.l.b16 %v477
    %v574 = vunpack.c.l.b16 %v478
    %v575 = vunpack.c.l.b16 %v479
    %v576 = vunpack.c.l.b16 %v480
    %v577 = vunpack.c.l.b16 %v481
    %v578 = vunpack.c.l.b16 %v482
    %v579 = vunpack.c.l.b16 %v483
    %v580 = vunpack.c.l.b16 %v484
    %v581 = vunpack.c.l.b16 %v485
    %v582 = vunpack.c.l.b16 %v486
    %v583 = vunpack.c.l.b16 %v487
    %v584 = vunpack.c.l.b16 %v488
    %v585 = vunpack.c.l.b16 %v489
    %v586 = vunpack.c.l.b16 %v490
    %v587 = vunpack.c.l.b16 %v491
    %v588 = vunpack.c.l.b16 %v492
    %v589 = vunpack.c.l.b16 %v493
    %v590 = vunpack.c.l.b16 %v494
    %v591 = vunpack.c.l.b16 %v495
    %v592 = vpack.c.b16 %v545, %v544
    %v593 = vpack.c.b16 %v547, %v546
    %v594 = vpack.c.b16 %v549, %v548
    %v595 = vpack.c.b16 %v551, %v550
    %v596 = vpack.c.b16 %v553, %v552
    %v597 = vpack.c.b16 %v555, %v554
    %v598 = vpack.c.b16 %v557, %v556
    %v599 = vpack.c.b16 %v559, %v558
    %v600 = vpack.c.b16 %v561, %v560
    %v601 = vpack.c.b16 %v563, %v562
    %v602 = vpack.c.b16 %v565, %v564
    %v603 = vpack.c.b16 %v567, %v566
    %v604 = vpack.c.b16 %v569, %v568
    %v605 = vpack.c.b16 %v571, %v570
    %v606 = vpack.c.b16 %v573, %v572
    %v607 = vpack.c.b16 %v575, %v574
    %v608 = vpack.c.b16 %v577, %v576
    %v609 = vpack.c.b16 %v579, %v578
    %v610 = vpack.c.b16 %v581, %v580
    %v611 = vpack.c.b16 %v583, %v582
    %v612 = vpack.c.b16 %v585, %v584
    %v613 = vpack.c.b16 %v587, %v586
    %v614 = vpack.c.b16 %v589, %v588
    %v615 = vpack.c.b16 %v591, %v590
    %640 = vmatprep.subr.bf16.mxu0 0
    %641 = vmatpush1.bf16.msra.mxu0 %v592
    %642 = vmatprep.subr.bf16.mxu0 0
    %643 = vmatpush1.bf16.msra.mxu0 %v593
    %644 = vmatprep.subr.bf16.mxu0 0
    %645 = vmatpush1.bf16.msra.mxu0 %v594
    %646 = vmatprep.subr.bf16.mxu0 0
    %647 = vmatpush1.bf16.msra.mxu0 %v595
    %648 = vmatprep.subr.bf16.mxu0 0
    %649 = vmatpush1.bf16.msra.mxu0 %v596
    %650 = vmatprep.subr.bf16.mxu0 0
    %651 = vmatpush1.bf16.msra.mxu0 %v597
    %652 = vmatprep.subr.bf16.mxu0 0
    %653 = vmatpush1.bf16.msra.mxu0 %v598
    %654 = vmatprep.subr.bf16.mxu0 0
    %655 = vmatpush1.bf16.msra.mxu0 %v599
    %656 = vmatprep.subr.bf16.mxu0 0
    %657 = vmatpush1.bf16.msra.mxu0 %v600
    %658 = vmatprep.subr.bf16.mxu0 0
    %659 = vmatpush1.bf16.msra.mxu0 %v601
    %660 = vmatprep.subr.bf16.mxu0 0
    %661 = vmatpush1.bf16.msra.mxu0 %v602
    %662 = vmatprep.subr.bf16.mxu0 0
    %663 = vmatpush1.bf16.msra.mxu0 %v603
    %664 = vmatprep.subr.bf16.mxu0 0
    %665 = vmatpush1.bf16.msra.mxu0 %v604
    %666 = vmatprep.subr.bf16.mxu0 0
    %667 = vmatpush1.bf16.msra.mxu0 %v605
    %668 = vmatprep.subr.bf16.mxu0 0
    %669 = vmatpush1.bf16.msra.mxu0 %v606
    %670 = vmatprep.subr.bf16.mxu0 0
    %671 = vmatpush1.bf16.msra.mxu0 %v607
    %672 = vmatprep.mubr.bf16.mxu0 %v446
    %673 = vmatmul.mubr.bf16.gmra.mrb[0].mxu0 %v445
    %v674 = vpop.f32.mrb[0].mxu0
    %v675 = vadd.f32 0.0, %v674
    %v676 = vpop.f32.mrb[0].mxu0
    %v677 = vpop.f32.mrb[0].mxu0
    %v678 = vadd.f32 0.0, %v677
    %v679 = vpop.f32.mrb[0].mxu0
    %680 = vdwg.mxu0
    %681 = vmatprep.subr.bf16.mxu0 0
    %682 = vmatpush1.bf16.msra.mxu0 %v608
    %683 = vmatprep.subr.bf16.mxu0 0
    %684 = vmatpush1.bf16.msra.mxu0 %v609
    %685 = vmatprep.subr.bf16.mxu0 0
    %686 = vmatpush1.bf16.msra.mxu0 %v610
    %687 = vmatprep.subr.bf16.mxu0 0
    %688 = vmatpush1.bf16.msra.mxu0 %v611
    %689 = vmatprep.subr.bf16.mxu0 0
    %690 = vmatpush1.bf16.msra.mxu0 %v612
    %691 = vmatprep.subr.bf16.mxu0 0
    %692 = vmatpush1.bf16.msra.mxu0 %v613
    %693 = vmatprep.subr.bf16.mxu0 0
    %694 = vmatpush1.bf16.msra.mxu0 %v614
    %695 = vmatprep.subr.bf16.mxu0 0
    %696 = vmatpush1.bf16.msra.mxu0 %v615
    %697 = vmatprep.subr.bf16.mxu0 0
    %698 = vmatpush1.bf16.msra.mxu0 0
    %699 = vmatprep.subr.bf16.mxu0 0
    %700 = vmatpush1.bf16.msra.mxu0 0
    %701 = vmatprep.subr.bf16.mxu0 0
    %702 = vmatpush1.bf16.msra.mxu0 0
    %703 = vmatprep.subr.bf16.mxu0 0
    %704 = vmatpush1.bf16.msra.mxu0 0
    %705 = vmatprep.subr.bf16.mxu0 0
    %706 = vmatpush1.bf16.msra.mxu0 0
    %707 = vmatprep.subr.bf16.mxu0 0
    %708 = vmatpush1.bf16.msra.mxu0 0
    %709 = vmatprep.subr.bf16.mxu0 0
    %710 = vmatpush1.bf16.msra.mxu0 0
    %711 = vmatprep.subr.bf16.mxu0 0
    %712 = vmatpush1.bf16.msra.mxu0 0
    %713 = vmatprep.mubr.bf16.mxu0 0
    %714 = vmatmul.mubr.bf16.gmra.mrb[0].mxu0 %v447
    %v715 = vpop.f32.mrb[0].mxu0
    %v716 = vadd.f32 %v675, %v715
    %v717 = vpop.f32.mrb[0].mxu0
    %v718 = vpop.f32.mrb[0].mxu0
    %v719 = vadd.f32 %v678, %v718
    %v720 = vpop.f32.mrb[0].mxu0
    %721 = vdwg.mxu0
    %v722 = vld [vmem:[%s6] sm:$0xf]
    %v723 = vlaneseq
    %v724 = vshrl.u32 %v723, 7
    %v725 = vsub.s32 0, %v724
    %v726 = vrot.slane %v722, %v725
    %v727 = vmul.f32 %v726, %v716
    %v728 = vmul.f32 %v726, %v719
    %v729 = vlaneseq
    %v730 = vshrl.u32 %v729, 7
    %v731 = vsub.s32 1, %v730
    %v732 = vrot.slane %v722, %v731
    %v733 = vadd.f32 %v727, %v732
    %v734 = vadd.f32 %v728, %v732
    %v735 = vtanh.pop %v733
    %v736 = vtanh.pop %v734
    %v737 = vlaneseq
    %v738 = vshrl.u32 %v737, 7
    %v739 = vsub.s32 2, %v738
    %v740 = vrot.slane %v722, %v739
    %v741 = vmul.f32 %v740, %v735
    %v742 = vmul.f32 %v740, %v736
    %v743 = vlaneseq
    %v744 = vshrl.u32 %v743, 7
    %v745 = vsub.s32 3, %v744
    %v746 = vrot.slane %v722, %v745
    %v747 = vadd.f32 %v741, %v746
    %v748 = vadd.f32 %v742, %v746
    %v749 = vpack.c.bf16 %v748, %v747
    %750 = vst [vmem:[#allocation2 + $0x18] sm:$0xff] %v749
    %v751 = vld [vmem:[#allocation2] sm:$0xff]
    %v752 = vld [vmem:[#allocation2 + $0x8] sm:$0xff]
    %v753 = vld [vmem:[#allocation2 + $0x10] sm:$0xff]
    %v754 = vld [vmem:[#allocation2 + $0x18] sm:$0xff]
    %v755 = vld [vmem:[#allocation11] sm:$0xf]
    %v756 = vld [vmem:[#allocation11 + $0x4] sm:$0xf]
    %v757 = vld [vmem:[#allocation11 + $0x8] sm:$0xf]
    %v758 = vld [vmem:[#allocation11 + $0xc] sm:$0xf]
    %v759 = vld [vmem:[#allocation11 + $0x10] sm:$0xf]
    %v760 = vld [vmem:[#allocation11 + $0x14] sm:$0xf]
    %v761 = vld [vmem:[#allocation11 + $0x18] sm:$0xf]
    %v762 = vld [vmem:[#allocation11 + $0x1c] sm:$0xf]
    %v763 = vld [vmem:[#allocation11 + $0x20] sm:$0xf]
    %v764 = vld [vmem:[#allocation11 + $0x24] sm:$0xf]
    %v765 = vld [vmem:[#allocation11 + $0x28] sm:$0xf]
    %v766 = vld [vmem:[#allocation11 + $0x2c] sm:$0xf]
    %v767 = vld [vmem:[#allocation11 + $0x30] sm:$0xf]
    %v768 = vld [vmem:[#allocation11 + $0x34] sm:$0xf]
    %v769 = vld [vmem:[#allocation11 + $0x38] sm:$0xf]
    %v770 = vld [vmem:[#allocation11 + $0x3c] sm:$0xf]
    %v771 = vld [vmem:[#allocation11 + $0x40] sm:$0xf]
    %v772 = vld [vmem:[#allocation11 + $0x44] sm:$0xf]
    %v773 = vld [vmem:[#allocation11 + $0x48] sm:$0xf]
    %v774 = vld [vmem:[#allocation11 + $0x4c] sm:$0xf]
    %v775 = vld [vmem:[#allocation11 + $0x50] sm:$0xf]
    %v776 = vld [vmem:[#allocation11 + $0x54] sm:$0xf]
    %v777 = vld [vmem:[#allocation11 + $0x58] sm:$0xf]
    %v778 = vld [vmem:[#allocation11 + $0x5c] sm:$0xf]
    %v779 = vld [vmem:[#allocation11 + $0x60] sm:$0xf]
    %v780 = vld [vmem:[#allocation11 + $0x64] sm:$0xf]
    %v781 = vld [vmem:[#allocation11 + $0x68] sm:$0xf]
    %v782 = vld [vmem:[#allocation11 + $0x6c] sm:$0xf]
    %v783 = vld [vmem:[#allocation11 + $0x70] sm:$0xf]
    %v784 = vld [vmem:[#allocation11 + $0x74] sm:$0xf]
    %v785 = vld [vmem:[#allocation11 + $0x78] sm:$0xf]
    %v786 = vld [vmem:[#allocation11 + $0x7c] sm:$0xf]
    %v787 = vld [vmem:[#allocation11 + $0x80] sm:$0xf]
    %v788 = vld [vmem:[#allocation11 + $0x84] sm:$0xf]
    %v789 = vld [vmem:[#allocation11 + $0x88] sm:$0xf]
    %v790 = vld [vmem:[#allocation11 + $0x8c] sm:$0xf]
    %v791 = vld [vmem:[#allocation11 + $0x90] sm:$0xf]
    %v792 = vld [vmem:[#allocation11 + $0x94] sm:$0xf]
    %v793 = vld [vmem:[#allocation11 + $0x98] sm:$0xf]
    %v794 = vld [vmem:[#allocation11 + $0x9c] sm:$0xf]
    %v795 = vld [vmem:[#allocation11 + $0xa0] sm:$0xf]
    %v796 = vld [vmem:[#allocation11 + $0xa4] sm:$0xf]
    %v797 = vld [vmem:[#allocation11 + $0xa8] sm:$0xf]
    %v798 = vld [vmem:[#allocation11 + $0xac] sm:$0xf]
    %v799 = vld [vmem:[#allocation11 + $0xb0] sm:$0xf]
    %v800 = vld [vmem:[#allocation11 + $0xb4] sm:$0xf]
    %v801 = vld [vmem:[#allocation11 + $0xb8] sm:$0xf]
    %v802 = vld [vmem:[#allocation11 + $0xbc] sm:$0xf]
    %v803 = vld [vmem:[#allocation11 + $0xc0] sm:$0xf]
    %v804 = vld [vmem:[#allocation11 + $0xc4] sm:$0xf]
    %v805 = vld [vmem:[#allocation11 + $0xc8] sm:$0xf]
    %v806 = vld [vmem:[#allocation11 + $0xcc] sm:$0xf]
    %v807 = vld [vmem:[#allocation11 + $0xd0] sm:$0xf]
    %v808 = vld [vmem:[#allocation11 + $0xd4] sm:$0xf]
    %v809 = vld [vmem:[#allocation11 + $0xd8] sm:$0xf]
    %v810 = vld [vmem:[#allocation11 + $0xdc] sm:$0xf]
    %v811 = vld [vmem:[#allocation11 + $0xe0] sm:$0xf]
    %v812 = vld [vmem:[#allocation11 + $0xe4] sm:$0xf]
    %v813 = vld [vmem:[#allocation11 + $0xe8] sm:$0xf]
    %v814 = vld [vmem:[#allocation11 + $0xec] sm:$0xf]
    %v815 = vld [vmem:[#allocation11 + $0xf0] sm:$0xf]
    %v816 = vld [vmem:[#allocation11 + $0xf4] sm:$0xf]
    %v817 = vld [vmem:[#allocation11 + $0xf8] sm:$0xf]
    %v818 = vld [vmem:[#allocation11 + $0xfc] sm:$0xf]
    %v883 = vunpack.c.l.b16 %v755
    %v884 = vunpack.c.l.b16 %v756
    %v885 = vunpack.c.l.b16 %v757
    %v886 = vunpack.c.l.b16 %v758
    %v887 = vunpack.c.l.b16 %v759
    %v888 = vunpack.c.l.b16 %v760
    %v889 = vunpack.c.l.b16 %v761
    %v890 = vunpack.c.l.b16 %v762
    %v891 = vunpack.c.l.b16 %v763
    %v892 = vunpack.c.l.b16 %v764
    %v893 = vunpack.c.l.b16 %v765
    %v894 = vunpack.c.l.b16 %v766
    %v895 = vunpack.c.l.b16 %v767
    %v896 = vunpack.c.l.b16 %v768
    %v897 = vunpack.c.l.b16 %v769
    %v898 = vunpack.c.l.b16 %v770
    %v899 = vunpack.c.l.b16 %v771
    %v900 = vunpack.c.l.b16 %v772
    %v901 = vunpack.c.l.b16 %v773
    %v902 = vunpack.c.l.b16 %v774
    %v903 = vunpack.c.l.b16 %v775
    %v904 = vunpack.c.l.b16 %v776
    %v905 = vunpack.c.l.b16 %v777
    %v906 = vunpack.c.l.b16 %v778
    %v907 = vunpack.c.l.b16 %v779
    %v908 = vunpack.c.l.b16 %v780
    %v909 = vunpack.c.l.b16 %v781
    %v910 = vunpack.c.l.b16 %v782
    %v911 = vunpack.c.l.b16 %v783
    %v912 = vunpack.c.l.b16 %v784
    %v913 = vunpack.c.l.b16 %v785
    %v914 = vunpack.c.l.b16 %v786
    %v915 = vunpack.c.l.b16 %v787
    %v916 = vunpack.c.l.b16 %v788
    %v917 = vunpack.c.l.b16 %v789
    %v918 = vunpack.c.l.b16 %v790
    %v919 = vunpack.c.l.b16 %v791
    %v920 = vunpack.c.l.b16 %v792
    %v921 = vunpack.c.l.b16 %v793
    %v922 = vunpack.c.l.b16 %v794
    %v923 = vunpack.c.l.b16 %v795
    %v924 = vunpack.c.l.b16 %v796
    %v925 = vunpack.c.l.b16 %v797
    %v926 = vunpack.c.l.b16 %v798
    %v927 = vunpack.c.l.b16 %v799
    %v928 = vunpack.c.l.b16 %v800
    %v929 = vunpack.c.l.b16 %v801
    %v930 = vunpack.c.l.b16 %v802
    %v931 = vunpack.c.l.b16 %v803
    %v932 = vunpack.c.l.b16 %v804
    %v933 = vunpack.c.l.b16 %v805
    %v934 = vunpack.c.l.b16 %v806
    %v935 = vunpack.c.l.b16 %v807
    %v936 = vunpack.c.l.b16 %v808
    %v937 = vunpack.c.l.b16 %v809
    %v938 = vunpack.c.l.b16 %v810
    %v939 = vunpack.c.l.b16 %v811
    %v940 = vunpack.c.l.b16 %v812
    %v941 = vunpack.c.l.b16 %v813
    %v942 = vunpack.c.l.b16 %v814
    %v943 = vunpack.c.l.b16 %v815
    %v944 = vunpack.c.l.b16 %v816
    %v945 = vunpack.c.l.b16 %v817
    %v946 = vunpack.c.l.b16 %v818
    %v947 = vpack.c.b16 %v884, %v883
    %v948 = vpack.c.b16 %v886, %v885
    %v949 = vpack.c.b16 %v888, %v887
    %v950 = vpack.c.b16 %v890, %v889
    %v951 = vpack.c.b16 %v892, %v891
    %v952 = vpack.c.b16 %v894, %v893
    %v953 = vpack.c.b16 %v896, %v895
    %v954 = vpack.c.b16 %v898, %v897
    %v955 = vpack.c.b16 %v900, %v899
    %v956 = vpack.c.b16 %v902, %v901
    %v957 = vpack.c.b16 %v904, %v903
    %v958 = vpack.c.b16 %v906, %v905
    %v959 = vpack.c.b16 %v908, %v907
    %v960 = vpack.c.b16 %v910, %v909
    %v961 = vpack.c.b16 %v912, %v911
    %v962 = vpack.c.b16 %v914, %v913
    %v963 = vpack.c.b16 %v916, %v915
    %v964 = vpack.c.b16 %v918, %v917
    %v965 = vpack.c.b16 %v920, %v919
    %v966 = vpack.c.b16 %v922, %v921
    %v967 = vpack.c.b16 %v924, %v923
    %v968 = vpack.c.b16 %v926, %v925
    %v969 = vpack.c.b16 %v928, %v927
    %v970 = vpack.c.b16 %v930, %v929
    %v971 = vpack.c.b16 %v932, %v931
    %v972 = vpack.c.b16 %v934, %v933
    %v973 = vpack.c.b16 %v936, %v935
    %v974 = vpack.c.b16 %v938, %v937
    %v975 = vpack.c.b16 %v940, %v939
    %v976 = vpack.c.b16 %v942, %v941
    %v977 = vpack.c.b16 %v944, %v943
    %v978 = vpack.c.b16 %v946, %v945
    %1011 = vmatprep.subr.bf16.mxu0 0
    %1012 = vmatpush1.bf16.msra.mxu0 %v947
    %1013 = vmatprep.subr.bf16.mxu0 0
    %1014 = vmatpush1.bf16.msra.mxu0 %v948
    %1015 = vmatprep.subr.bf16.mxu0 0
    %1016 = vmatpush1.bf16.msra.mxu0 %v949
    %1017 = vmatprep.subr.bf16.mxu0 0
    %1018 = vmatpush1.bf16.msra.mxu0 %v950
    %1019 = vmatprep.subr.bf16.mxu0 0
    %1020 = vmatpush1.bf16.msra.mxu0 %v951
    %1021 = vmatprep.subr.bf16.mxu0 0
    %1022 = vmatpush1.bf16.msra.mxu0 %v952
    %1023 = vmatprep.subr.bf16.mxu0 0
    %1024 = vmatpush1.bf16.msra.mxu0 %v953
    %1025 = vmatprep.subr.bf16.mxu0 0
    %1026 = vmatpush1.bf16.msra.mxu0 %v954
    %1027 = vmatprep.subr.bf16.mxu0 0
    %1028 = vmatpush1.bf16.msra.mxu0 %v955
    %1029 = vmatprep.subr.bf16.mxu0 0
    %1030 = vmatpush1.bf16.msra.mxu0 %v956
    %1031 = vmatprep.subr.bf16.mxu0 0
    %1032 = vmatpush1.bf16.msra.mxu0 %v957
    %1033 = vmatprep.subr.bf16.mxu0 0
    %1034 = vmatpush1.bf16.msra.mxu0 %v958
    %1035 = vmatprep.subr.bf16.mxu0 0
    %1036 = vmatpush1.bf16.msra.mxu0 %v959
    %1037 = vmatprep.subr.bf16.mxu0 0
    %1038 = vmatpush1.bf16.msra.mxu0 %v960
    %1039 = vmatprep.subr.bf16.mxu0 0
    %1040 = vmatpush1.bf16.msra.mxu0 %v961
    %1041 = vmatprep.subr.bf16.mxu0 0
    %1042 = vmatpush1.bf16.msra.mxu0 %v962
    %1043 = vmatprep.mubr.bf16.mxu0 %v752
    %1044 = vmatmul.mubr.bf16.gmra.mrb[0].mxu0 %v751
    %v1045 = vpop.f32.mrb[0].mxu0
    %v1046 = vadd.f32 0.0, %v1045
    %v1047 = vpop.f32.mrb[0].mxu0
    %v1048 = vpop.f32.mrb[0].mxu0
    %v1049 = vadd.f32 0.0, %v1048
    %v1050 = vpop.f32.mrb[0].mxu0
    %1051 = vdwg.mxu0
    %1052 = vmatprep.subr.bf16.mxu0 0
    %1053 = vmatpush1.bf16.msra.mxu0 %v963
    %1054 = vmatprep.subr.bf16.mxu0 0
    %1055 = vmatpush1.bf16.msra.mxu0 %v964
    %1056 = vmatprep.subr.bf16.mxu0 0
    %1057 = vmatpush1.bf16.msra.mxu0 %v965
    %1058 = vmatprep.subr.bf16.mxu0 0
    %1059 = vmatpush1.bf16.msra.mxu0 %v966
    %1060 = vmatprep.subr.bf16.mxu0 0
    %1061 = vmatpush1.bf16.msra.mxu0 %v967
    %1062 = vmatprep.subr.bf16.mxu0 0
    %1063 = vmatpush1.bf16.msra.mxu0 %v968
    %1064 = vmatprep.subr.bf16.mxu0 0
    %1065 = vmatpush1.bf16.msra.mxu0 %v969
    %1066 = vmatprep.subr.bf16.mxu0 0
    %1067 = vmatpush1.bf16.msra.mxu0 %v970
    %1068 = vmatprep.subr.bf16.mxu0 0
    %1069 = vmatpush1.bf16.msra.mxu0 %v971
    %1070 = vmatprep.subr.bf16.mxu0 0
    %1071 = vmatpush1.bf16.msra.mxu0 %v972
    %1072 = vmatprep.subr.bf16.mxu0 0
    %1073 = vmatpush1.bf16.msra.mxu0 %v973
    %1074 = vmatprep.subr.bf16.mxu0 0
    %1075 = vmatpush1.bf16.msra.mxu0 %v974
    %1076 = vmatprep.subr.bf16.mxu0 0
    %1077 = vmatpush1.bf16.msra.mxu0 %v975
    %1078 = vmatprep.subr.bf16.mxu0 0
    %1079 = vmatpush1.bf16.msra.mxu0 %v976
    %1080 = vmatprep.subr.bf16.mxu0 0
    %1081 = vmatpush1.bf16.msra.mxu0 %v977
    %1082 = vmatprep.subr.bf16.mxu0 0
    %1083 = vmatpush1.bf16.msra.mxu0 %v978
    %1084 = vmatprep.mubr.bf16.mxu0 %v754
    %1085 = vmatmul.mubr.bf16.gmra.mrb[0].mxu0 %v753
    %v1086 = vpop.f32.mrb[0].mxu0
    %v1087 = vadd.f32 %v1046, %v1086
    %v1088 = vpop.f32.mrb[0].mxu0
    %v1089 = vpop.f32.mrb[0].mxu0
    %v1090 = vadd.f32 %v1049, %v1089
    %v1091 = vpop.f32.mrb[0].mxu0
    %1092 = vdwg.mxu0
    %v1093 = vld [vmem:[%s8] sm:$0xf]
    %v1094 = vlaneseq
    %v1095 = vshrl.u32 %v1094, 7
    %v1096 = vsub.s32 0, %v1095
    %v1097 = vrot.slane %v1093, %v1096
    %v1098 = vmul.f32 %v1097, %v1087
    %v1099 = vmul.f32 %v1097, %v1090
    %v1100 = vlaneseq
    %v1101 = vshrl.u32 %v1100, 7
    %v1102 = vsub.s32 1, %v1101
    %v1103 = vrot.slane %v1093, %v1102
    %v1104 = vadd.f32 %v1098, %v1103
    %v1105 = vadd.f32 %v1099, %v1103
    %v1106 = vtanh.pop %v1104
    %v1107 = vtanh.pop %v1105
    %v1108 = vlaneseq
    %v1109 = vshrl.u32 %v1108, 7
    %v1110 = vsub.s32 2, %v1109
    %v1111 = vrot.slane %v1093, %v1110
    %v1112 = vmul.f32 %v1111, %v1106
    %v1113 = vmul.f32 %v1111, %v1107
    %v1114 = vlaneseq
    %v1115 = vshrl.u32 %v1114, 7
    %v1116 = vsub.s32 3, %v1115
    %v1117 = vrot.slane %v1093, %v1116
    %v1118 = vadd.f32 %v1112, %v1117
    %v1119 = vadd.f32 %v1113, %v1117
    %1120 = vst [vmem:[#allocation12] sm:$0xff] %v1118
    %1121 = vst [vmem:[#allocation12 + $0x8] sm:$0xff] %v1119
    // Predicated region
    $region58: #{tpu_custom_call.1} parent=1 // pred_check
      _
    $region59: #{tpu_custom_call.1} parent=1 // pred_check_branch
      %1123 = sbr.rel (0) target = $region61
    $region60: #{tpu_custom_call.1} parent=1 // pred_region
      %s1125 = ssub.s32 256, 256
      %1126 = vsyncadd [#allocation5], %s1125
      %s1127 = sshll.u32 [#allocation12], 4
      %s1128 = int_to_ptr.vmem [resolvable:$true] %s1127
      %1133 = dma.vmem_to_hbm [thread:$0]  %s1128, 256, %s9, [#allocation5], 128, 128, 8
    $region61: #{tpu_custom_call.1} parent=1 // pred_fallthru
      _
    // Predicated region
    $region62: #{tpu_custom_call.1} parent=1 // pred_check
      _
    $region63: #{tpu_custom_call.1} parent=1 // pred_check_branch
      %1135 = sbr.rel (0) target = $region65
    $region64: #{tpu_custom_call.1} parent=1 // pred_region
      %1136 = dma.done [#allocation5], 256
    $region65: #{tpu_custom_call.1} parent=1 // pred_fallthru
      _
    %1137 = vsyncpa [#allocation4], 1
    %1138 = vsyncpa [#allocation7], 1
    %1139 = vsyncpa [#allocation10], 1
    %1140 = vsyncpa [#allocation5], 1

// kernel: tpu_custom_call.1
$region0: #{tpu_custom_call.1}
  #allocation0 [shape = 'u32[]', space=smem, size = 0x4, offset = 0x4, fixed_abs, tag = 'smem constant byte address 0x4 - core index']
  #allocation1 [shape = 'u32[144,128]{1,0:T(1,128)}', space=vmem, size = 0x12000, scoped, tag = 'internal scratch']
  #allocation2 [shape = 'bf16[16,512]{1,0:T(16,128)(2,1)}', space=vmem, size = 0x4000, scoped, tag = 'scratch operand']
  %s0 = inlined_call_operand.hbm [shape: bf16[16,128], index: 0, kind: input, shape index: {}]
  %s1 = inlined_call_operand.hbm [shape: bf16[128,128], index: 1, kind: input, shape index: {}]
  %s2 = inlined_call_operand.vmem [shape: f32[4,128], index: 2, kind: input, shape index: {}]
  %s3 = inlined_call_operand.hbm [shape: bf16[256,128], index: 3, kind: input, shape index: {}]
  %s4 = inlined_call_operand.vmem [shape: f32[4,128], index: 4, kind: input, shape index: {}]
  %s5 = inlined_call_operand.hbm [shape: bf16[384,128], index: 5, kind: input, shape index: {}]
  %s6 = inlined_call_operand.vmem [shape: f32[4,128], index: 6, kind: input, shape index: {}]
  %s7 = inlined_call_operand.hbm [shape: bf16[512,128], index: 7, kind: input, shape index: {}]
  %s8 = inlined_call_operand.vmem [shape: f32[4,128], index: 8, kind: input, shape index: {}]
  %s9 = inlined_call_operand.hbm [shape: f32[16,128], index: 9, kind: output, shape index: {}]
  %s10 = sld [smem:[#allocation0]]
  $region66: #{tpu_custom_call.1} parent=0
    _
  %s12 = ssub.s32 1, %s10
  %s13 = scalar_select 0, %s12, %s10
  $region1: #{tpu_custom_call.1} parent=0
    #allocation3 [shape = 'u8[4096]{0}', space=vmem, size = 0x1000, scoped, tag = 'input window, operand 0, single buffered']
    #allocation4 [shape = 's32[1]{0}', space=sflag, size = 0x4, scoped, tag = 'scoped memory for tpu_custom_call.1']
    #allocation5 [shape = 's32[1]{0}', space=sflag, size = 0x4, scoped, tag = 'scoped memory for tpu_custom_call.1']
    #allocation6 [shape = 'u8[32768]{0}', space=vmem, size = 0x8000, scoped, tag = 'input window, operand 1, single buffered']
    #allocation7 [shape = 's32[1]{0}', space=sflag, size = 0x4, scoped, tag = 'scoped memory for tpu_custom_call.1']
    #allocation8 [shape = 'u8[65536]{0}', space=vmem, size = 0x10000, scoped, tag = 'input window, operand 3, single buffered']
    #allocation9 [shape = 'u8[98304]{0}', space=vmem, size = 0x18000, scoped, tag = 'input window, operand 5, single buffered']
    #allocation10 [shape = 's32[1]{0}', space=sflag, size = 0x4, scoped, tag = 'scoped memory for tpu_custom_call.1']
    #allocation11 [shape = 'u8[131072]{0}', space=vmem, size = 0x20000, scoped, tag = 'input window, operand 7, single buffered']
    #allocation12 [shape = 'u8[8192]{0}', space=vmem, size = 0x2000, scoped, tag = 'output window, operand 0, single buffered']
    %14 = vsyncpa [#allocation4], 0
    %15 = vsyncpa [#allocation7], 0
    %16 = vsyncpa [#allocation10], 0
    %17 = vsyncpa [#allocation5], 0
    // Predicated region
    $region2: #{tpu_custom_call.1} parent=1 // pred_check
      _
    $region3: #{tpu_custom_call.1} parent=1 // pred_check_branch
      %19 = sbr.rel (0) target = $region5
    $region4: #{tpu_custom_call.1} parent=1 // pred_region
      %s21 = ssub.s32 128, 128
      %22 = vsyncadd [#allocation4], %s21
      %s23 = sshll.u32 [#allocation3], 4
      %s24 = int_to_ptr.vmem [resolvable:$true] %s23
      %29 = dma.hbm_to_vmem [thread:$0]  %s0, 128, %s24, [#allocation4], 64, 64, 4
    $region5: #{tpu_custom_call.1} parent=1 // pred_fallthru
      _
    // Predicated region
    $region6: #{tpu_custom_call.1} parent=1 // pred_check
      _
    $region7: #{tpu_custom_call.1} parent=1 // pred_check_branch
      %31 = sbr.rel (0) target = $region9
    $region8: #{tpu_custom_call.1} parent=1 // pred_region
      %s33 = ssub.s32 1024, 1024
      %34 = vsyncadd [#allocation7], %s33
      %s35 = sshll.u32 [#allocation6], 4
      %s36 = int_to_ptr.vmem [resolvable:$true] %s35
      %41 = dma.hbm_to_vmem [thread:$0]  %s1, 1024, %s36, [#allocation7], 64, 64, 4
    $region9: #{tpu_custom_call.1} parent=1 // pred_fallthru
      _
    // Predicated region
    $region10: #{tpu_custom_call.1} parent=1 // pred_check
      _
    $region11: #{tpu_custom_call.1} parent=1 // pred_check_branch
      %43 = sbr.rel (0) target = $region13
    $region12: #{tpu_custom_call.1} parent=1 // pred_region
      _
    $region13: #{tpu_custom_call.1} parent=1 // pred_fallthru
      _
    // Predicated region
    $region14: #{tpu_custom_call.1} parent=1 // pred_check
      _
    $region15: #{tpu_custom_call.1} parent=1 // pred_check_branch
      %45 = sbr.rel (0) target = $region17
    $region16: #{tpu_custom_call.1} parent=1 // pred_region
      %s47 = ssub.s32 2048, 2048
      %48 = vsyncadd [#allocation7], %s47
      %s49 = sshll.u32 [#allocation8], 4
      %s50 = int_to_ptr.vmem [resolvable:$true] %s49
      %55 = dma.hbm_to_vmem [thread:$0]  %s3, 2048, %s50, [#allocation7], 64, 64, 4
    $region17: #{tpu_custom_call.1} parent=1 // pred_fallthru
      _
    // Predicated region
    $region18: #{tpu_custom_call.1} parent=1 // pred_check
      _
    $region19: #{tpu_custom_call.1} parent=1 // pred_check_branch
      %57 = sbr.rel (0) target = $region21
    $region20: #{tpu_custom_call.1} parent=1 // pred_region
      _
    $region21: #{tpu_custom_call.1} parent=1 // pred_fallthru
      _
    // Predicated region
    $region22: #{tpu_custom_call.1} parent=1 // pred_check
      _
    $region23: #{tpu_custom_call.1} parent=1 // pred_check_branch
      %59 = sbr.rel (0) target = $region25
    $region24: #{tpu_custom_call.1} parent=1 // pred_region
      %s61 = ssub.s32 3072, 3072
      %62 = vsyncadd [#allocation10], %s61
      %s63 = sshll.u32 [#allocation9], 4
      %s64 = int_to_ptr.vmem [resolvable:$true] %s63
      %69 = dma.hbm_to_vmem [thread:$0]  %s5, 3072, %s64, [#allocation10], 64, 64, 4
    $region25: #{tpu_custom_call.1} parent=1 // pred_fallthru
      _
    // Predicated region
    $region26: #{tpu_custom_call.1} parent=1 // pred_check
      _
    $region27: #{tpu_custom_call.1} parent=1 // pred_check_branch
      %71 = sbr.rel (0) target = $region29
    $region28: #{tpu_custom_call.1} parent=1 // pred_region
      _
    $region29: #{tpu_custom_call.1} parent=1 // pred_fallthru
      _
    // Predicated region
    $region30: #{tpu_custom_call.1} parent=1 // pred_check
      _
    $region31: #{tpu_custom_call.1} parent=1 // pred_check_branch
      %73 = sbr.rel (0) target = $region33
    $region32: #{tpu_custom_call.1} parent=1 // pred_region
      %s75 = ssub.s32 4096, 4096
      %76 = vsyncadd [#allocation10], %s75
      %s77 = sshll.u32 [#allocation11], 4
      %s78 = int_to_ptr.vmem [resolvable:$true] %s77
      %83 = dma.hbm_to_vmem [thread:$0]  %s7, 4096, %s78, [#allocation10], 64, 64, 4
    $region33: #{tpu_custom_call.1} parent=1 // pred_fallthru
      _
    // Predicated region
    $region34: #{tpu_custom_call.1} parent=1 // pred_check
      _
    $region35: #{tpu_custom_call.1} parent=1 // pred_check_branch
      %85 = sbr.rel (0) target = $region37
    $region36: #{tpu_custom_call.1} parent=1 // pred_region
      _
    $region37: #{tpu_custom_call.1} parent=1 // pred_fallthru
      _
    // Predicated region
    $region38: #{tpu_custom_call.1} parent=1 // pred_check
      _
    $region39: #{tpu_custom_call.1} parent=1 // pred_check_branch
      %87 = sbr.rel (0) target = $region41
    $region40: #{tpu_custom_call.1} parent=1 // pred_region
      %88 = dma.done [#allocation4], 128
    $region41: #{tpu_custom_call.1} parent=1 // pred_fallthru
      _
    // Predicated region
    $region42: #{tpu_custom_call.1} parent=1 // pred_check
      _
    $region43: #{tpu_custom_call.1} parent=1 // pred_check_branch
      %90 = sbr.rel (0) target = $region45
    $region44: #{tpu_custom_call.1} parent=1 // pred_region
      %91 = dma.done [#allocation7], 1024
    $region45: #{tpu_custom_call.1} parent=1 // pred_fallthru
      _
    // Predicated region
    $region46: #{tpu_custom_call.1} parent=1 // pred_check
      _
    $region47: #{tpu_custom_call.1} parent=1 // pred_check_branch
      %93 = sbr.rel (0) target = $region49
    $region48: #{tpu_custom_call.1} parent=1 // pred_region
      %94 = dma.done [#allocation7], 2048
    $region49: #{tpu_custom_call.1} parent=1 // pred_fallthru
      _
    // Predicated region
    $region50: #{tpu_custom_call.1} parent=1 // pred_check
      _
    $region51: #{tpu_custom_call.1} parent=1 // pred_check_branch
      %96 = sbr.rel (0) target = $region53
    $region52: #{tpu_custom_call.1} parent=1 // pred_region
      %97 = dma.done [#allocation10], 3072
    $region53: #{tpu_custom_call.1} parent=1 // pred_fallthru
      _
    // Predicated region
    $region54: #{tpu_custom_call.1} parent=1 // pred_check
      _
    $region55: #{tpu_custom_call.1} parent=1 // pred_check_branch
      %99 = sbr.rel (0) target = $region57
    $region56: #{tpu_custom_call.1} parent=1 // pred_region
      %100 = dma.done [#allocation10], 4096
    $region57: #{tpu_custom_call.1} parent=1 // pred_fallthru
      _
    %v102 = vld [vmem:[#allocation3] sm:$0xf]
    %v103 = vld [vmem:[#allocation3 + $0x4] sm:$0xf]
    %v106 = vunpack.c.l.b16 %v102
    %v107 = vunpack.c.l.b16 %v103
    %v108 = vpack.c.b16 %v107, %v106
    %110 = vst [vmem:[#allocation2] sm:$0xff] %v108
    %v111 = vld [vmem:[#allocation6] sm:$0xf]
    %v112 = vld [vmem:[#allocation6 + $0x4] sm:$0xf]
    %v113 = vld [vmem:[#allocation6 + $0x8] sm:$0xf]
    %v114 = vld [vmem:[#allocation6 + $0xc] sm:$0xf]
    %v115 = vld [vmem:[#allocation6 + $0x10] sm:$0xf]
    %v116 = vld [vmem:[#allocation6 + $0x14] sm:$0xf]
    %v117 = vld [vmem:[#allocation6 + $0x18] sm:$0xf]
    %v118 = vld [vmem:[#allocation6 + $0x1c] sm:$0xf]
    %v119 = vld [vmem:[#allocation6 + $0x20] sm:$0xf]
    %v120 = vld [vmem:[#allocation6 + $0x24] sm:$0xf]
    %v121 = vld [vmem:[#allocation6 + $0x28] sm:$0xf]
    %v122 = vld [vmem:[#allocation6 + $0x2c] sm:$0xf]
    %v123 = vld [vmem:[#allocation6 + $0x30] sm:$0xf]
    %v124 = vld [vmem:[#allocation6 + $0x34] sm:$0xf]
    %v125 = vld [vmem:[#allocation6 + $0x38] sm:$0xf]
    %v126 = vld [vmem:[#allocation6 + $0x3c] sm:$0xf]
    %v143 = vunpack.c.l.b16 %v111
    %v144 = vunpack.c.l.b16 %v112
    %v145 = vunpack.c.l.b16 %v113
    %v146 = vunpack.c.l.b16 %v114
    %v147 = vunpack.c.l.b16 %v115
    %v148 = vunpack.c.l.b16 %v116
    %v149 = vunpack.c.l.b16 %v117
    %v150 = vunpack.c.l.b16 %v118
    %v151 = vunpack.c.l.b16 %v119
    %v152 = vunpack.c.l.b16 %v120
    %v153 = vunpack.c.l.b16 %v121
    %v154 = vunpack.c.l.b16 %v122
    %v155 = vunpack.c.l.b16 %v123
    %v156 = vunpack.c.l.b16 %v124
    %v157 = vunpack.c.l.b16 %v125
    %v158 = vunpack.c.l.b16 %v126
    %v159 = vpack.c.b16 %v144, %v143
    %v160 = vpack.c.b16 %v146, %v145
    %v161 = vpack.c.b16 %v148, %v147
    %v162 = vpack.c.b16 %v150, %v149
    %v163 = vpack.c.b16 %v152, %v151
    %v164 = vpack.c.b16 %v154, %v153
    %v165 = vpack.c.b16 %v156, %v155
    %v166 = vpack.c.b16 %v158, %v157
    %175 = vmatprep.subr.bf16.mxu0 0
    %176 = vmatpush1.bf16.msra.mxu0 %v159
    %177 = vmatprep.subr.bf16.mxu0 0
    %178 = vmatpush1.bf16.msra.mxu0 %v160
    %179 = vmatprep.subr.bf16.mxu0 0
    %180 = vmatpush1.bf16.msra.mxu0 %v161
    %181 = vmatprep.subr.bf16.mxu0 0
    %182 = vmatpush1.bf16.msra.mxu0 %v162
    %183 = vmatprep.subr.bf16.mxu0 0
    %184 = vmatpush1.bf16.msra.mxu0 %v163
    %185 = vmatprep.subr.bf16.mxu0 0
    %186 = vmatpush1.bf16.msra.mxu0 %v164
    %187 = vmatprep.subr.bf16.mxu0 0
    %188 = vmatpush1.bf16.msra.mxu0 %v165
    %189 = vmatprep.subr.bf16.mxu0 0
    %190 = vmatpush1.bf16.msra.mxu0 %v166
    %191 = vmatprep.subr.bf16.mxu0 0
    %192 = vmatpush1.bf16.msra.mxu0 0
    %193 = vmatprep.subr.bf16.mxu0 0
    %194 = vmatpush1.bf16.msra.mxu0 0
    %195 = vmatprep.subr.bf16.mxu0 0
    %196 = vmatpush1.bf16.msra.mxu0 0
    %197 = vmatprep.subr.bf16.mxu0 0
    %198 = vmatpush1.bf16.msra.mxu0 0
    %199 = vmatprep.subr.bf16.mxu0 0
    %200 = vmatpush1.bf16.msra.mxu0 0
    %201 = vmatprep.subr.bf16.mxu0 0
    %202 = vmatpush1.bf16.msra.mxu0 0
    %203 = vmatprep.subr.bf16.mxu0 0
    %204 = vmatpush1.bf16.msra.mxu0 0
    %205 = vmatprep.subr.bf16.mxu0 0
    %206 = vmatpush1.bf16.msra.mxu0 0
    %207 = vmatprep.mubr.bf16.mxu0 0
    %208 = vmatmul.mubr.bf16.gmra.mrb[0].mxu0 %v108
    %v209 = vpop.f32.mrb[0].mxu0
    %v210 = vadd.f32 0.0, %v209
    %v211 = vpop.f32.mrb[0].mxu0
    %v212 = vpop.f32.mrb[0].mxu0
    %v213 = vadd.f32 0.0, %v212
    %v214 = vpop.f32.mrb[0].mxu0
    %215 = vdwg.mxu0
    %v216 = vld [vmem:[%s2] sm:$0xf]
    %v217 = vlaneseq
    %v218 = vshrl.u32 %v217, 7
    %v219 = vsub.s32 0, %v218
    %v220 = vrot.slane %v216, %v219
    %v221 = vmul.f32 %v220, %v210
    %v222 = vmul.f32 %v220, %v213
    %v223 = vlaneseq
    %v224 = vshrl.u32 %v223, 7
    %v225 = vsub.s32 1, %v224
    %v226 = vrot.slane %v216, %v225
    %v227 = vadd.f32 %v221, %v226
    %v228 = vadd.f32 %v222, %v226
    %v229 = vtanh.pop %v227
    %v230 = vtanh.pop %v228
    %v231 = vlaneseq
    %v232 = vshrl.u32 %v231, 7
    %v233 = vsub.s32 2, %v232
    %v234 = vrot.slane %v216, %v233
    %v235 = vmul.f32 %v234, %v229
    %v236 = vmul.f32 %v234, %v230
    %v237 = vlaneseq
    %v238 = vshrl.u32 %v237, 7
    %v239 = vsub.s32 3, %v238
    %v240 = vrot.slane %v216, %v239
    %v241 = vadd.f32 %v235, %v240
    %v242 = vadd.f32 %v236, %v240
    %v243 = vpack.c.bf16 %v242, %v241
    %244 = vst [vmem:[#allocation2 + $0x8] sm:$0xff] %v243
    %v245 = vld [vmem:[#allocation2] sm:$0xff]
    %v246 = vld [vmem:[#allocation2 + $0x8] sm:$0xff]
    %v247 = vld [vmem:[#allocation8] sm:$0xf]
    %v248 = vld [vmem:[#allocation8 + $0x4] sm:$0xf]
    %v249 = vld [vmem:[#allocation8 + $0x8] sm:$0xf]
    %v250 = vld [vmem:[#allocation8 + $0xc] sm:$0xf]
    %v251 = vld [vmem:[#allocation8 + $0x10] sm:$0xf]
    %v252 = vld [vmem:[#allocation8 + $0x14] sm:$0xf]
    %v253 = vld [vmem:[#allocation8 + $0x18] sm:$0xf]
    %v254 = vld [vmem:[#allocation8 + $0x1c] sm:$0xf]
    %v255 = vld [vmem:[#allocation8 + $0x20] sm:$0xf]
    %v256 = vld [vmem:[#allocation8 + $0x24] sm:$0xf]
    %v257 = vld [vmem:[#allocation8 + $0x28] sm:$0xf]
    %v258 = vld [vmem:[#allocation8 + $0x2c] sm:$0xf]
    %v259 = vld [vmem:[#allocation8 + $0x30] sm:$0xf]
    %v260 = vld [vmem:[#allocation8 + $0x34] sm:$0xf]
    %v261 = vld [vmem:[#allocation8 + $0x38] sm:$0xf]
    %v262 = vld [vmem:[#allocation8 + $0x3c] sm:$0xf]
    %v263 = vld [vmem:[#allocation8 + $0x40] sm:$0xf]
    %v264 = vld [vmem:[#allocation8 + $0x44] sm:$0xf]
    %v265 = vld [vmem:[#allocation8 + $0x48] sm:$0xf]
    %v266 = vld [vmem:[#allocation8 + $0x4c] sm:$0xf]
    %v267 = vld [vmem:[#allocation8 + $0x50] sm:$0xf]
    %v268 = vld [vmem:[#allocation8 + $0x54] sm:$0xf]
    %v269 = vld [vmem:[#allocation8 + $0x58] sm:$0xf]
    %v270 = vld [vmem:[#allocation8 + $0x5c] sm:$0xf]
    %v271 = vld [vmem:[#allocation8 + $0x60] sm:$0xf]
    %v272 = vld [vmem:[#allocation8 + $0x64] sm:$0xf]
    %v273 = vld [vmem:[#allocation8 + $0x68] sm:$0xf]
    %v274 = vld [vmem:[#allocation8 + $0x6c] sm:$0xf]
    %v275 = vld [vmem:[#allocation8 + $0x70] sm:$0xf]
    %v276 = vld [vmem:[#allocation8 + $0x74] sm:$0xf]
    %v277 = vld [vmem:[#allocation8 + $0x78] sm:$0xf]
    %v278 = vld [vmem:[#allocation8 + $0x7c] sm:$0xf]
    %v311 = vunpack.c.l.b16 %v247
    %v312 = vunpack.c.l.b16 %v248
    %v313 = vunpack.c.l.b16 %v249
    %v314 = vunpack.c.l.b16 %v250
    %v315 = vunpack.c.l.b16 %v251
    %v316 = vunpack.c.l.b16 %v252
    %v317 = vunpack.c.l.b16 %v253
    %v318 = vunpack.c.l.b16 %v254
    %v319 = vunpack.c.l.b16 %v255
    %v320 = vunpack.c.l.b16 %v256
    %v321 = vunpack.c.l.b16 %v257
    %v322 = vunpack.c.l.b16 %v258
    %v323 = vunpack.c.l.b16 %v259
    %v324 = vunpack.c.l.b16 %v260
    %v325 = vunpack.c.l.b16 %v261
    %v326 = vunpack.c.l.b16 %v262
    %v327 = vunpack.c.l.b16 %v263
    %v328 = vunpack.c.l.b16 %v264
    %v329 = vunpack.c.l.b16 %v265
    %v330 = vunpack.c.l.b16 %v266
    %v331 = vunpack.c.l.b16 %v267
    %v332 = vunpack.c.l.b16 %v268
    %v333 = vunpack.c.l.b16 %v269
    %v334 = vunpack.c.l.b16 %v270
    %v335 = vunpack.c.l.b16 %v271
    %v336 = vunpack.c.l.b16 %v272
    %v337 = vunpack.c.l.b16 %v273
    %v338 = vunpack.c.l.b16 %v274
    %v339 = vunpack.c.l.b16 %v275
    %v340 = vunpack.c.l.b16 %v276
    %v341 = vunpack.c.l.b16 %v277
    %v342 = vunpack.c.l.b16 %v278
    %v343 = vpack.c.b16 %v312, %v311
    %v344 = vpack.c.b16 %v314, %v313
    %v345 = vpack.c.b16 %v316, %v315
    %v346 = vpack.c.b16 %v318, %v317
    %v347 = vpack.c.b16 %v320, %v319
    %v348 = vpack.c.b16 %v322, %v321
    %v349 = vpack.c.b16 %v324, %v323
    %v350 = vpack.c.b16 %v326, %v325
    %v351 = vpack.c.b16 %v328, %v327
    %v352 = vpack.c.b16 %v330, %v329
    %v353 = vpack.c.b16 %v332, %v331
    %v354 = vpack.c.b16 %v334, %v333
    %v355 = vpack.c.b16 %v336, %v335
    %v356 = vpack.c.b16 %v338, %v337
    %v357 = vpack.c.b16 %v340, %v339
    %v358 = vpack.c.b16 %v342, %v341
    %375 = vmatprep.subr.bf16.mxu0 0
    %376 = vmatpush1.bf16.msra.mxu0 %v343
    %377 = vmatprep.subr.bf16.mxu0 0
    %378 = vmatpush1.bf16.msra.mxu0 %v344
    %379 = vmatprep.subr.bf16.mxu0 0
    %380 = vmatpush1.bf16.msra.mxu0 %v345
    %381 = vmatprep.subr.bf16.mxu0 0
    %382 = vmatpush1.bf16.msra.mxu0 %v346
    %383 = vmatprep.subr.bf16.mxu0 0
    %384 = vmatpush1.bf16.msra.mxu0 %v347
    %385 = vmatprep.subr.bf16.mxu0 0
    %386 = vmatpush1.bf16.msra.mxu0 %v348
    %387 = vmatprep.subr.bf16.mxu0 0
    %388 = vmatpush1.bf16.msra.mxu0 %v349
    %389 = vmatprep.subr.bf16.mxu0 0
    %390 = vmatpush1.bf16.msra.mxu0 %v350
    %391 = vmatprep.subr.bf16.mxu0 0
    %392 = vmatpush1.bf16.msra.mxu0 %v351
    %393 = vmatprep.subr.bf16.mxu0 0
    %394 = vmatpush1.bf16.msra.mxu0 %v352
    %395 = vmatprep.subr.bf16.mxu0 0
    %396 = vmatpush1.bf16.msra.mxu0 %v353
    %397 = vmatprep.subr.bf16.mxu0 0
    %398 = vmatpush1.bf16.msra.mxu0 %v354
    %399 = vmatprep.subr.bf16.mxu0 0
    %400 = vmatpush1.bf16.msra.mxu0 %v355
    %401 = vmatprep.subr.bf16.mxu0 0
    %402 = vmatpush1.bf16.msra.mxu0 %v356
    %403 = vmatprep.subr.bf16.mxu0 0
    %404 = vmatpush1.bf16.msra.mxu0 %v357
    %405 = vmatprep.subr.bf16.mxu0 0
    %406 = vmatpush1.bf16.msra.mxu0 %v358
    %407 = vmatprep.mubr.bf16.mxu0 %v246
    %408 = vmatmul.mubr.bf16.gmra.mrb[0].mxu0 %v245
    %v409 = vpop.f32.mrb[0].mxu0
    %v410 = vadd.f32 0.0, %v409
    %v411 = vpop.f32.mrb[0].mxu0
    %v412 = vpop.f32.mrb[0].mxu0
    %v413 = vadd.f32 0.0, %v412
    %v414 = vpop.f32.mrb[0].mxu0
    %415 = vdwg.mxu0
    %v416 = vld [vmem:[%s4] sm:$0xf]
    %v417 = vlaneseq
    %v418 = vshrl.u32 %v417, 7
    %v419 = vsub.s32 0, %v418
    %v420 = vrot.slane %v416, %v419
    %v421 = vmul.f32 %v420, %v410
    %v422 = vmul.f32 %v420, %v413
    %v423 = vlaneseq
    %v424 = vshrl.u32 %v423, 7
    %v425 = vsub.s32 1, %v424
    %v426 = vrot.slane %v416, %v425
    %v427 = vadd.f32 %v421, %v426
    %v428 = vadd.f32 %v422, %v426
    %v429 = vtanh.pop %v427
    %v430 = vtanh.pop %v428
    %v431 = vlaneseq
    %v432 = vshrl.u32 %v431, 7
    %v433 = vsub.s32 2, %v432
    %v434 = vrot.slane %v416, %v433
    %v435 = vmul.f32 %v434, %v429
    %v436 = vmul.f32 %v434, %v430
    %v437 = vlaneseq
    %v438 = vshrl.u32 %v437, 7
    %v439 = vsub.s32 3, %v438
    %v440 = vrot.slane %v416, %v439
    %v441 = vadd.f32 %v435, %v440
    %v442 = vadd.f32 %v436, %v440
    %v443 = vpack.c.bf16 %v442, %v441
    %444 = vst [vmem:[#allocation2 + $0x10] sm:$0xff] %v443
    %v445 = vld [vmem:[#allocation2] sm:$0xff]
    %v446 = vld [vmem:[#allocation2 + $0x8] sm:$0xff]
    %v447 = vld [vmem:[#allocation2 + $0x10] sm:$0xff]
    %v448 = vld [vmem:[#allocation9] sm:$0xf]
    %v449 = vld [vmem:[#allocation9 + $0x4] sm:$0xf]
    %v450 = vld [vmem:[#allocation9 + $0x8] sm:$0xf]
    %v451 = vld [vmem:[#allocation9 + $0xc] sm:$0xf]
    %v452 = vld [vmem:[#allocation9 + $0x10] sm:$0xf]
    %v453 = vld [vmem:[#allocation9 + $0x14] sm:$0xf]
    %v454 = vld [vmem:[#allocation9 + $0x18] sm:$0xf]
    %v455 = vld [vmem:[#allocation9 + $0x1c] sm:$0xf]
    %v456 = vld [vmem:[#allocation9 + $0x20] sm:$0xf]
    %v457 = vld [vmem:[#allocation9 + $0x24] sm:$0xf]
    %v458 = vld [vmem:[#allocation9 + $0x28] sm:$0xf]
    %v459 = vld [vmem:[#allocation9 + $0x2c] sm:$0xf]
    %v460 = vld [vmem:[#allocation9 + $0x30] sm:$0xf]
    %v461 = vld [vmem:[#allocation9 + $0x34] sm:$0xf]
    %v462 = vld [vmem:[#allocation9 + $0x38] sm:$0xf]
    %v463 = vld [vmem:[#allocation9 + $0x3c] sm:$0xf]
    %v464 = vld [vmem:[#allocation9 + $0x40] sm:$0xf]
    %v465 = vld [vmem:[#allocation9 + $0x44] sm:$0xf]
    %v466 = vld [vmem:[#allocation9 + $0x48] sm:$0xf]
    %v467 = vld [vmem:[#allocation9 + $0x4c] sm:$0xf]
    %v468 = vld [vmem:[#allocation9 + $0x50] sm:$0xf]
    %v469 = vld [vmem:[#allocation9 + $0x54] sm:$0xf]
    %v470 = vld [vmem:[#allocation9 + $0x58] sm:$0xf]
    %v471 = vld [vmem:[#allocation9 + $0x5c] sm:$0xf]
    %v472 = vld [vmem:[#allocation9 + $0x60] sm:$0xf]
    %v473 = vld [vmem:[#allocation9 + $0x64] sm:$0xf]
    %v474 = vld [vmem:[#allocation9 + $0x68] sm:$0xf]
    %v475 = vld [vmem:[#allocation9 + $0x6c] sm:$0xf]
    %v476 = vld [vmem:[#allocation9 + $0x70] sm:$0xf]
    %v477 = vld [vmem:[#allocation9 + $0x74] sm:$0xf]
    %v478 = vld [vmem:[#allocation9 + $0x78] sm:$0xf]
    %v479 = vld [vmem:[#allocation9 + $0x7c] sm:$0xf]
    %v480 = vld [vmem:[#allocation9 + $0x80] sm:$0xf]
    %v481 = vld [vmem:[#allocation9 + $0x84] sm:$0xf]
    %v482 = vld [vmem:[#allocation9 + $0x88] sm:$0xf]
    %v483 = vld [vmem:[#allocation9 + $0x8c] sm:$0xf]
    %v484 = vld [vmem:[#allocation9 + $0x90] sm:$0xf]
    %v485 = vld [vmem:[#allocation9 + $0x94] sm:$0xf]
    %v486 = vld [vmem:[#allocation9 + $0x98] sm:$0xf]
    %v487 = vld [vmem:[#allocation9 + $0x9c] sm:$0xf]
    %v488 = vld [vmem:[#allocation9 + $0xa0] sm:$0xf]
    %v489 = vld [vmem:[#allocation9 + $0xa4] sm:$0xf]
    %v490 = vld [vmem:[#allocation9 + $0xa8] sm:$0xf]
    %v491 = vld [vmem:[#allocation9 + $0xac] sm:$0xf]
    %v492 = vld [vmem:[#allocation9 + $0xb0] sm:$0xf]
    %v493 = vld [vmem:[#allocation9 + $0xb4] sm:$0xf]
    %v494 = vld [vmem:[#allocation9 + $0xb8] sm:$0xf]
    %v495 = vld [vmem:[#allocation9 + $0xbc] sm:$0xf]
    %v544 = vunpack.c.l.b16 %v448
    %v545 = vunpack.c.l.b16 %v449
    %v546 = vunpack.c.l.b16 %v450
    %v547 = vunpack.c.l.b16 %v451
    %v548 = vunpack.c.l.b16 %v452
    %v549 = vunpack.c.l.b16 %v453
    %v550 = vunpack.c.l.b16 %v454
    %v551 = vunpack.c.l.b16 %v455
    %v552 = vunpack.c.l.b16 %v456
    %v553 = vunpack.c.l.b16 %v457
    %v554 = vunpack.c.l.b16 %v458
    %v555 = vunpack.c.l.b16 %v459
    %v556 = vunpack.c.l.b16 %v460
    %v557 = vunpack.c.l.b16 %v461
    %v558 = vunpack.c.l.b16 %v462
    %v559 = vunpack.c.l.b16 %v463
    %v560 = vunpack.c.l.b16 %v464
    %v561 = vunpack.c.l.b16 %v465
    %v562 = vunpack.c.l.b16 %v466
    %v563 = vunpack.c.l.b16 %v467
    %v564 = vunpack.c.l.b16 %v468
    %v565 = vunpack.c.l.b16 %v469
    %v566 = vunpack.c.l.b16 %v470
    %v567 = vunpack.c.l.b16 %v471
    %v568 = vunpack.c.l.b16 %v472
    %v569 = vunpack.c.l.b16 %v473
    %v570 = vunpack.c.l.b16 %v474
    %v571 = vunpack.c.l.b16 %v475
    %v572 = vunpack.c.l.b16 %v476
    %v573 = vunpack.c.l.b16 %v477
    %v574 = vunpack.c.l.b16 %v478
    %v575 = vunpack.c.l.b16 %v479
    %v576 = vunpack.c.l.b16 %v480
    %v577 = vunpack.c.l.b16 %v481
    %v578 = vunpack.c.l.b16 %v482
    %v579 = vunpack.c.l.b16 %v483
    %v580 = vunpack.c.l.b16 %v484
    %v581 = vunpack.c.l.b16 %v485
    %v582 = vunpack.c.l.b16 %v486
    %v583 = vunpack.c.l.b16 %v487
    %v584 = vunpack.c.l.b16 %v488
    %v585 = vunpack.c.l.b16 %v489
    %v586 = vunpack.c.l.b16 %v490
    %v587 = vunpack.c.l.b16 %v491
    %v588 = vunpack.c.l.b16 %v492
    %v589 = vunpack.c.l.b16 %v493
    %v590 = vunpack.c.l.b16 %v494
    %v591 = vunpack.c.l.b16 %v495
    %v592 = vpack.c.b16 %v545, %v544
    %v593 = vpack.c.b16 %v547, %v546
    %v594 = vpack.c.b16 %v549, %v548
    %v595 = vpack.c.b16 %v551, %v550
    %v596 = vpack.c.b16 %v553, %v552
    %v597 = vpack.c.b16 %v555, %v554
    %v598 = vpack.c.b16 %v557, %v556
    %v599 = vpack.c.b16 %v559, %v558
    %v600 = vpack.c.b16 %v561, %v560
    %v601 = vpack.c.b16 %v563, %v562
    %v602 = vpack.c.b16 %v565, %v564
    %v603 = vpack.c.b16 %v567, %v566
    %v604 = vpack.c.b16 %v569, %v568
    %v605 = vpack.c.b16 %v571, %v570
    %v606 = vpack.c.b16 %v573, %v572
    %v607 = vpack.c.b16 %v575, %v574
    %v608 = vpack.c.b16 %v577, %v576
    %v609 = vpack.c.b16 %v579, %v578
    %v610 = vpack.c.b16 %v581, %v580
    %v611 = vpack.c.b16 %v583, %v582
    %v612 = vpack.c.b16 %v585, %v584
    %v613 = vpack.c.b16 %v587, %v586
    %v614 = vpack.c.b16 %v589, %v588
    %v615 = vpack.c.b16 %v591, %v590
    %640 = vmatprep.subr.bf16.mxu0 0
    %641 = vmatpush1.bf16.msra.mxu0 %v592
    %642 = vmatprep.subr.bf16.mxu0 0
    %643 = vmatpush1.bf16.msra.mxu0 %v593
    %644 = vmatprep.subr.bf16.mxu0 0
    %645 = vmatpush1.bf16.msra.mxu0 %v594
    %646 = vmatprep.subr.bf16.mxu0 0
    %647 = vmatpush1.bf16.msra.mxu0 %v595
    %648 = vmatprep.subr.bf16.mxu0 0
    %649 = vmatpush1.bf16.msra.mxu0 %v596
    %650 = vmatprep.subr.bf16.mxu0 0
    %651 = vmatpush1.bf16.msra.mxu0 %v597
    %652 = vmatprep.subr.bf16.mxu0 0
    %653 = vmatpush1.bf16.msra.mxu0 %v598
    %654 = vmatprep.subr.bf16.mxu0 0
    %655 = vmatpush1.bf16.msra.mxu0 %v599
    %656 = vmatprep.subr.bf16.mxu0 0
    %657 = vmatpush1.bf16.msra.mxu0 %v600
    %658 = vmatprep.subr.bf16.mxu0 0
    %659 = vmatpush1.bf16.msra.mxu0 %v601
    %660 = vmatprep.subr.bf16.mxu0 0
    %661 = vmatpush1.bf16.msra.mxu0 %v602
    %662 = vmatprep.subr.bf16.mxu0 0
    %663 = vmatpush1.bf16.msra.mxu0 %v603
    %664 = vmatprep.subr.bf16.mxu0 0
    %665 = vmatpush1.bf16.msra.mxu0 %v604
    %666 = vmatprep.subr.bf16.mxu0 0
    %667 = vmatpush1.bf16.msra.mxu0 %v605
    %668 = vmatprep.subr.bf16.mxu0 0
    %669 = vmatpush1.bf16.msra.mxu0 %v606
    %670 = vmatprep.subr.bf16.mxu0 0
    %671 = vmatpush1.bf16.msra.mxu0 %v607
    %672 = vmatprep.mubr.bf16.mxu0 %v446
    %673 = vmatmul.mubr.bf16.gmra.mrb[0].mxu0 %v445
    %v674 = vpop.f32.mrb[0].mxu0
    %v675 = vadd.f32 0.0, %v674
    %v676 = vpop.f32.mrb[0].mxu0
    %v677 = vpop.f32.mrb[0].mxu0
    %v678 = vadd.f32 0.0, %v677
    %v679 = vpop.f32.mrb[0].mxu0
    %680 = vdwg.mxu0
    %681 = vmatprep.subr.bf16.mxu0 0
    %682 = vmatpush1.bf16.msra.mxu0 %v608
    %683 = vmatprep.subr.bf16.mxu0 0
    %684 = vmatpush1.bf16.msra.mxu0 %v609
    %685 = vmatprep.subr.bf16.mxu0 0
    %686 = vmatpush1.bf16.msra.mxu0 %v610
    %687 = vmatprep.subr.bf16.mxu0 0
    %688 = vmatpush1.bf16.msra.mxu0 %v611
    %689 = vmatprep.subr.bf16.mxu0 0
    %690 = vmatpush1.bf16.msra.mxu0 %v612
    %691 = vmatprep.subr.bf16.mxu0 0
    %692 = vmatpush1.bf16.msra.mxu0 %v613
    %693 = vmatprep.subr.bf16.mxu0 0
    %694 = vmatpush1.bf16.msra.mxu0 %v614
    %695 = vmatprep.subr.bf16.mxu0 0
    %696 = vmatpush1.bf16.msra.mxu0 %v615
    %697 = vmatprep.subr.bf16.mxu0 0
    %698 = vmatpush1.bf16.msra.mxu0 0
    %699 = vmatprep.subr.bf16.mxu0 0
    %700 = vmatpush1.bf16.msra.mxu0 0
    %701 = vmatprep.subr.bf16.mxu0 0
    %702 = vmatpush1.bf16.msra.mxu0 0
    %703 = vmatprep.subr.bf16.mxu0 0
    %704 = vmatpush1.bf16.msra.mxu0 0
    %705 = vmatprep.subr.bf16.mxu0 0
    %706 = vmatpush1.bf16.msra.mxu0 0
    %707 = vmatprep.subr.bf16.mxu0 0
    %708 = vmatpush1.bf16.msra.mxu0 0
    %709 = vmatprep.subr.bf16.mxu0 0
    %710 = vmatpush1.bf16.msra.mxu0 0
    %711 = vmatprep.subr.bf16.mxu0 0
    %712 = vmatpush1.bf16.msra.mxu0 0
    %713 = vmatprep.mubr.bf16.mxu0 0
    %714 = vmatmul.mubr.bf16.gmra.mrb[0].mxu0 %v447
    %v715 = vpop.f32.mrb[0].mxu0
    %v716 = vadd.f32 %v675, %v715
    %v717 = vpop.f32.mrb[0].mxu0
    %v718 = vpop.f32.mrb[0].mxu0
    %v719 = vadd.f32 %v678, %v718
    %v720 = vpop.f32.mrb[0].mxu0
    %721 = vdwg.mxu0
    %v722 = vld [vmem:[%s6] sm:$0xf]
    %v723 = vlaneseq
    %v724 = vshrl.u32 %v723, 7
    %v725 = vsub.s32 0, %v724
    %v726 = vrot.slane %v722, %v725
    %v727 = vmul.f32 %v726, %v716
    %v728 = vmul.f32 %v726, %v719
    %v729 = vlaneseq
    %v730 = vshrl.u32 %v729, 7
    %v731 = vsub.s32 1, %v730
    %v732 = vrot.slane %v722, %v731
    %v733 = vadd.f32 %v727, %v732
    %v734 = vadd.f32 %v728, %v732
    %v735 = vtanh.pop %v733
    %v736 = vtanh.pop %v734
    %v737 = vlaneseq
    %v738 = vshrl.u32 %v737, 7
    %v739 = vsub.s32 2, %v738
    %v740 = vrot.slane %v722, %v739
    %v741 = vmul.f32 %v740, %v735
    %v742 = vmul.f32 %v740, %v736
    %v743 = vlaneseq
    %v744 = vshrl.u32 %v743, 7
    %v745 = vsub.s32 3, %v744
    %v746 = vrot.slane %v722, %v745
    %v747 = vadd.f32 %v741, %v746
    %v748 = vadd.f32 %v742, %v746
    %v749 = vpack.c.bf16 %v748, %v747
    %750 = vst [vmem:[#allocation2 + $0x18] sm:$0xff] %v749
    %v751 = vld [vmem:[#allocation2] sm:$0xff]
    %v752 = vld [vmem:[#allocation2 + $0x8] sm:$0xff]
    %v753 = vld [vmem:[#allocation2 + $0x10] sm:$0xff]
    %v754 = vld [vmem:[#allocation2 + $0x18] sm:$0xff]
    %v755 = vld [vmem:[#allocation11] sm:$0xf]
    %v756 = vld [vmem:[#allocation11 + $0x4] sm:$0xf]
    %v757 = vld [vmem:[#allocation11 + $0x8] sm:$0xf]
    %v758 = vld [vmem:[#allocation11 + $0xc] sm:$0xf]
    %v759 = vld [vmem:[#allocation11 + $0x10] sm:$0xf]
    %v760 = vld [vmem:[#allocation11 + $0x14] sm:$0xf]
    %v761 = vld [vmem:[#allocation11 + $0x18] sm:$0xf]
    %v762 = vld [vmem:[#allocation11 + $0x1c] sm:$0xf]
    %v763 = vld [vmem:[#allocation11 + $0x20] sm:$0xf]
    %v764 = vld [vmem:[#allocation11 + $0x24] sm:$0xf]
    %v765 = vld [vmem:[#allocation11 + $0x28] sm:$0xf]
    %v766 = vld [vmem:[#allocation11 + $0x2c] sm:$0xf]
    %v767 = vld [vmem:[#allocation11 + $0x30] sm:$0xf]
    %v768 = vld [vmem:[#allocation11 + $0x34] sm:$0xf]
    %v769 = vld [vmem:[#allocation11 + $0x38] sm:$0xf]
    %v770 = vld [vmem:[#allocation11 + $0x3c] sm:$0xf]
    %v771 = vld [vmem:[#allocation11 + $0x40] sm:$0xf]
    %v772 = vld [vmem:[#allocation11 + $0x44] sm:$0xf]
    %v773 = vld [vmem:[#allocation11 + $0x48] sm:$0xf]
    %v774 = vld [vmem:[#allocation11 + $0x4c] sm:$0xf]
    %v775 = vld [vmem:[#allocation11 + $0x50] sm:$0xf]
    %v776 = vld [vmem:[#allocation11 + $0x54] sm:$0xf]
    %v777 = vld [vmem:[#allocation11 + $0x58] sm:$0xf]
    %v778 = vld [vmem:[#allocation11 + $0x5c] sm:$0xf]
    %v779 = vld [vmem:[#allocation11 + $0x60] sm:$0xf]
    %v780 = vld [vmem:[#allocation11 + $0x64] sm:$0xf]
    %v781 = vld [vmem:[#allocation11 + $0x68] sm:$0xf]
    %v782 = vld [vmem:[#allocation11 + $0x6c] sm:$0xf]
    %v783 = vld [vmem:[#allocation11 + $0x70] sm:$0xf]
    %v784 = vld [vmem:[#allocation11 + $0x74] sm:$0xf]
    %v785 = vld [vmem:[#allocation11 + $0x78] sm:$0xf]
    %v786 = vld [vmem:[#allocation11 + $0x7c] sm:$0xf]
    %v787 = vld [vmem:[#allocation11 + $0x80] sm:$0xf]
    %v788 = vld [vmem:[#allocation11 + $0x84] sm:$0xf]
    %v789 = vld [vmem:[#allocation11 + $0x88] sm:$0xf]
    %v790 = vld [vmem:[#allocation11 + $0x8c] sm:$0xf]
    %v791 = vld [vmem:[#allocation11 + $0x90] sm:$0xf]
    %v792 = vld [vmem:[#allocation11 + $0x94] sm:$0xf]
    %v793 = vld [vmem:[#allocation11 + $0x98] sm:$0xf]
    %v794 = vld [vmem:[#allocation11 + $0x9c] sm:$0xf]
    %v795 = vld [vmem:[#allocation11 + $0xa0] sm:$0xf]
    %v796 = vld [vmem:[#allocation11 + $0xa4] sm:$0xf]
    %v797 = vld [vmem:[#allocation11 + $0xa8] sm:$0xf]
    %v798 = vld [vmem:[#allocation11 + $0xac] sm:$0xf]
    %v799 = vld [vmem:[#allocation11 + $0xb0] sm:$0xf]
    %v800 = vld [vmem:[#allocation11 + $0xb4] sm:$0xf]
    %v801 = vld [vmem:[#allocation11 + $0xb8] sm:$0xf]
    %v802 = vld [vmem:[#allocation11 + $0xbc] sm:$0xf]
    %v803 = vld [vmem:[#allocation11 + $0xc0] sm:$0xf]
    %v804 = vld [vmem:[#allocation11 + $0xc4] sm:$0xf]
    %v805 = vld [vmem:[#allocation11 + $0xc8] sm:$0xf]
    %v806 = vld [vmem:[#allocation11 + $0xcc] sm:$0xf]
    %v807 = vld [vmem:[#allocation11 + $0xd0] sm:$0xf]
    %v808 = vld [vmem:[#allocation11 + $0xd4] sm:$0xf]
    %v809 = vld [vmem:[#allocation11 + $0xd8] sm:$0xf]
    %v810 = vld [vmem:[#allocation11 + $0xdc] sm:$0xf]
    %v811 = vld [vmem:[#allocation11 + $0xe0] sm:$0xf]
    %v812 = vld [vmem:[#allocation11 + $0xe4] sm:$0xf]
    %v813 = vld [vmem:[#allocation11 + $0xe8] sm:$0xf]
    %v814 = vld [vmem:[#allocation11 + $0xec] sm:$0xf]
    %v815 = vld [vmem:[#allocation11 + $0xf0] sm:$0xf]
    %v816 = vld [vmem:[#allocation11 + $0xf4] sm:$0xf]
    %v817 = vld [vmem:[#allocation11 + $0xf8] sm:$0xf]
    %v818 = vld [vmem:[#allocation11 + $0xfc] sm:$0xf]
    %v883 = vunpack.c.l.b16 %v755
    %v884 = vunpack.c.l.b16 %v756
    %v885 = vunpack.c.l.b16 %v757
    %v886 = vunpack.c.l.b16 %v758
    %v887 = vunpack.c.l.b16 %v759
    %v888 = vunpack.c.l.b16 %v760
    %v889 = vunpack.c.l.b16 %v761
    %v890 = vunpack.c.l.b16 %v762
    %v891 = vunpack.c.l.b16 %v763
    %v892 = vunpack.c.l.b16 %v764
    %v893 = vunpack.c.l.b16 %v765
    %v894 = vunpack.c.l.b16 %v766
    %v895 = vunpack.c.l.b16 %v767
    %v896 = vunpack.c.l.b16 %v768
    %v897 = vunpack.c.l.b16 %v769
    %v898 = vunpack.c.l.b16 %v770
    %v899 = vunpack.c.l.b16 %v771
    %v900 = vunpack.c.l.b16 %v772
    %v901 = vunpack.c.l.b16 %v773
    %v902 = vunpack.c.l.b16 %v774
    %v903 = vunpack.c.l.b16 %v775
    %v904 = vunpack.c.l.b16 %v776
    %v905 = vunpack.c.l.b16 %v777
    %v906 = vunpack.c.l.b16 %v778
    %v907 = vunpack.c.l.b16 %v779
    %v908 = vunpack.c.l.b16 %v780
    %v909 = vunpack.c.l.b16 %v781
    %v910 = vunpack.c.l.b16 %v782
    %v911 = vunpack.c.l.b16 %v783
    %v912 = vunpack.c.l.b16 %v784
    %v913 = vunpack.c.l.b16 %v785
    %v914 = vunpack.c.l.b16 %v786
    %v915 = vunpack.c.l.b16 %v787
    %v916 = vunpack.c.l.b16 %v788
    %v917 = vunpack.c.l.b16 %v789
    %v918 = vunpack.c.l.b16 %v790
    %v919 = vunpack.c.l.b16 %v791
    %v920 = vunpack.c.l.b16 %v792
    %v921 = vunpack.c.l.b16 %v793
    %v922 = vunpack.c.l.b16 %v794
    %v923 = vunpack.c.l.b16 %v795
    %v924 = vunpack.c.l.b16 %v796
    %v925 = vunpack.c.l.b16 %v797
    %v926 = vunpack.c.l.b16 %v798
    %v927 = vunpack.c.l.b16 %v799
    %v928 = vunpack.c.l.b16 %v800
    %v929 = vunpack.c.l.b16 %v801
    %v930 = vunpack.c.l.b16 %v802
    %v931 = vunpack.c.l.b16 %v803
    %v932 = vunpack.c.l.b16 %v804
    %v933 = vunpack.c.l.b16 %v805
    %v934 = vunpack.c.l.b16 %v806
    %v935 = vunpack.c.l.b16 %v807
    %v936 = vunpack.c.l.b16 %v808
    %v937 = vunpack.c.l.b16 %v809
    %v938 = vunpack.c.l.b16 %v810
    %v939 = vunpack.c.l.b16 %v811
    %v940 = vunpack.c.l.b16 %v812
    %v941 = vunpack.c.l.b16 %v813
    %v942 = vunpack.c.l.b16 %v814
    %v943 = vunpack.c.l.b16 %v815
    %v944 = vunpack.c.l.b16 %v816
    %v945 = vunpack.c.l.b16 %v817
    %v946 = vunpack.c.l.b16 %v818
    %v947 = vpack.c.b16 %v884, %v883
    %v948 = vpack.c.b16 %v886, %v885
    %v949 = vpack.c.b16 %v888, %v887
    %v950 = vpack.c.b16 %v890, %v889
    %v951 = vpack.c.b16 %v892, %v891
    %v952 = vpack.c.b16 %v894, %v893
    %v953 = vpack.c.b16 %v896, %v895
    %v954 = vpack.c.b16 %v898, %v897
    %v955 = vpack.c.b16 %v900, %v899
    %v956 = vpack.c.b16 %v902, %v901
    %v957 = vpack.c.b16 %v904, %v903
    %v958 = vpack.c.b16 %v906, %v905
    %v959 = vpack.c.b16 %v908, %v907
    %v960 = vpack.c.b16 %v910, %v909
    %v961 = vpack.c.b16 %v912, %v911
    %v962 = vpack.c.b16 %v914, %v913
    %v963 = vpack.c.b16 %v916, %v915
    %v964 = vpack.c.b16 %v918, %v917
    %v965 = vpack.c.b16 %v920, %v919
    %v966 = vpack.c.b16 %v922, %v921
    %v967 = vpack.c.b16 %v924, %v923
    %v968 = vpack.c.b16 %v926, %v925
    %v969 = vpack.c.b16 %v928, %v927
    %v970 = vpack.c.b16 %v930, %v929
    %v971 = vpack.c.b16 %v932, %v931
    %v972 = vpack.c.b16 %v934, %v933
    %v973 = vpack.c.b16 %v936, %v935
    %v974 = vpack.c.b16 %v938, %v937
    %v975 = vpack.c.b16 %v940, %v939
    %v976 = vpack.c.b16 %v942, %v941
    %v977 = vpack.c.b16 %v944, %v943
    %v978 = vpack.c.b16 %v946, %v945
    %1011 = vmatprep.subr.bf16.mxu0 0
    %1012 = vmatpush1.bf16.msra.mxu0 %v947
    %1013 = vmatprep.subr.bf16.mxu0 0
    %1014 = vmatpush1.bf16.msra.mxu0 %v948
    %1015 = vmatprep.subr.bf16.mxu0 0
    %1016 = vmatpush1.bf16.msra.mxu0 %v949
    %1017 = vmatprep.subr.bf16.mxu0 0
    %1018 = vmatpush1.bf16.msra.mxu0 %v950
    %1019 = vmatprep.subr.bf16.mxu0 0
    %1020 = vmatpush1.bf16.msra.mxu0 %v951
    %1021 = vmatprep.subr.bf16.mxu0 0
    %1022 = vmatpush1.bf16.msra.mxu0 %v952
    %1023 = vmatprep.subr.bf16.mxu0 0
    %1024 = vmatpush1.bf16.msra.mxu0 %v953
    %1025 = vmatprep.subr.bf16.mxu0 0
    %1026 = vmatpush1.bf16.msra.mxu0 %v954
    %1027 = vmatprep.subr.bf16.mxu0 0
    %1028 = vmatpush1.bf16.msra.mxu0 %v955
    %1029 = vmatprep.subr.bf16.mxu0 0
    %1030 = vmatpush1.bf16.msra.mxu0 %v956
    %1031 = vmatprep.subr.bf16.mxu0 0
    %1032 = vmatpush1.bf16.msra.mxu0 %v957
    %1033 = vmatprep.subr.bf16.mxu0 0
    %1034 = vmatpush1.bf16.msra.mxu0 %v958
    %1035 = vmatprep.subr.bf16.mxu0 0
    %1036 = vmatpush1.bf16.msra.mxu0 %v959
    %1037 = vmatprep.subr.bf16.mxu0 0
    %1038 = vmatpush1.bf16.msra.mxu0 %v960
    %1039 = vmatprep.subr.bf16.mxu0 0
    %1040 = vmatpush1.bf16.msra.mxu0 %v961
    %1041 = vmatprep.subr.bf16.mxu0 0
    %1042 = vmatpush1.bf16.msra.mxu0 %v962
    %1043 = vmatprep.mubr.bf16.mxu0 %v752
    %1044 = vmatmul.mubr.bf16.gmra.mrb[0].mxu0 %v751
    %v1045 = vpop.f32.mrb[0].mxu0
    %v1046 = vadd.f32 0.0, %v1045
    %v1047 = vpop.f32.mrb[0].mxu0
    %v1048 = vpop.f32.mrb[0].mxu0
    %v1049 = vadd.f32 0.0, %v1048
    %v1050 = vpop.f32.mrb[0].mxu0
    %1051 = vdwg.mxu0
    %1052 = vmatprep.subr.bf16.mxu0 0
    %1053 = vmatpush1.bf16.msra.mxu0 %v963
    %1054 = vmatprep.subr.bf16.mxu0 0
    %1055 = vmatpush1.bf16.msra.mxu0 %v964
    %1056 = vmatprep.subr.bf16.mxu0 0
    %1057 = vmatpush1.bf16.msra.mxu0 %v965
    %1058 = vmatprep.subr.bf16.mxu0 0
    %1059 = vmatpush1.bf16.msra.mxu0 %v966
    %1060 = vmatprep.subr.bf16.mxu0 0
    %1061 = vmatpush1.bf16.msra.mxu0 %v967
    %1062 = vmatprep.subr.bf16.mxu0 0
    %1063 = vmatpush1.bf16.msra.mxu0 %v968
    %1064 = vmatprep.subr.bf16.mxu0 0
    %1065 = vmatpush1.bf16.msra.mxu0 %v969
    %1066 = vmatprep.subr.bf16.mxu0 0
    %1067 = vmatpush1.bf16.msra.mxu0 %v970
    %1068 = vmatprep.subr.bf16.mxu0 0
    %1069 = vmatpush1.bf16.msra.mxu0 %v971
    %1070 = vmatprep.subr.bf16.mxu0 0
    %1071 = vmatpush1.bf16.msra.mxu0 %v972
    %1072 = vmatprep.subr.bf16.mxu0 0
    %1073 = vmatpush1.bf16.msra.mxu0 %v973
    %1074 = vmatprep.subr.bf16.mxu0 0
    %1075 = vmatpush1.bf16.msra.mxu0 %v974
    %1076 = vmatprep.subr.bf16.mxu0 0
    %1077 = vmatpush1.bf16.msra.mxu0 %v975
    %1078 = vmatprep.subr.bf16.mxu0 0
    %1079 = vmatpush1.bf16.msra.mxu0 %v976
    %1080 = vmatprep.subr.bf16.mxu0 0
    %1081 = vmatpush1.bf16.msra.mxu0 %v977
    %1082 = vmatprep.subr.bf16.mxu0 0
    %1083 = vmatpush1.bf16.msra.mxu0 %v978
    %1084 = vmatprep.mubr.bf16.mxu0 %v754
    %1085 = vmatmul.mubr.bf16.gmra.mrb[0].mxu0 %v753
    %v1086 = vpop.f32.mrb[0].mxu0
    %v1087 = vadd.f32 %v1046, %v1086
    %v1088 = vpop.f32.mrb[0].mxu0
    %v1089 = vpop.f32.mrb[0].mxu0
    %v1090 = vadd.f32 %v1049, %v1089
    %v1091 = vpop.f32.mrb[0].mxu0
    %1092 = vdwg.mxu0
    %v1093 = vld [vmem:[%s8] sm:$0xf]
    %v1094 = vlaneseq
    %v1095 = vshrl.u32 %v1094, 7
    %v1096 = vsub.s32 0, %v1095
    %v1097 = vrot.slane %v1093, %v1096
    %v1098 = vmul.f32 %v1097, %v1087
    %v1099 = vmul.f32 %v1097, %v1090
    %v1100 = vlaneseq
    %v1101 = vshrl.u32 %v1100, 7
    %v1102 = vsub.s32 1, %v1101
    %v1103 = vrot.slane %v1093, %v1102
    %v1104 = vadd.f32 %v1098, %v1103
    %v1105 = vadd.f32 %v1099, %v1103
    %v1106 = vtanh.pop %v1104
    %v1107 = vtanh.pop %v1105
    %v1108 = vlaneseq
    %v1109 = vshrl.u32 %v1108, 7
    %v1110 = vsub.s32 2, %v1109
    %v1111 = vrot.slane %v1093, %v1110
    %v1112 = vmul.f32 %v1111, %v1106
    %v1113 = vmul.f32 %v1111, %v1107
    %v1114 = vlaneseq
    %v1115 = vshrl.u32 %v1114, 7
    %v1116 = vsub.s32 3, %v1115
    %v1117 = vrot.slane %v1093, %v1116
    %v1118 = vadd.f32 %v1112, %v1117
    %v1119 = vadd.f32 %v1113, %v1117
    %1120 = vst [vmem:[#allocation12] sm:$0xff] %v1118
    %1121 = vst [vmem:[#allocation12 + $0x8] sm:$0xff] %v1119
    // Predicated region
    $region58: #{tpu_custom_call.1} parent=1 // pred_check
      _
    $region59: #{tpu_custom_call.1} parent=1 // pred_check_branch
      %1123 = sbr.rel (0) target = $region61
    $region60: #{tpu_custom_call.1} parent=1 // pred_region
      %s1125 = ssub.s32 256, 256
      %1126 = vsyncadd [#allocation5], %s1125
      %s1127 = sshll.u32 [#allocation12], 4
      %s1128 = int_to_ptr.vmem [resolvable:$true] %s1127
      %1133 = dma.vmem_to_hbm [thread:$0]  %s1128, 256, %s9, [#allocation5], 128, 128, 8
    $region61: #{tpu_custom_call.1} parent=1 // pred_fallthru
      _
    // Predicated region
    $region62: #{tpu_custom_call.1} parent=1 // pred_check
      _
    $region63: #{tpu_custom_call.1} parent=1 // pred_check_branch
      %1135 = sbr.rel (0) target = $region65
    $region64: #{tpu_custom_call.1} parent=1 // pred_region
      %1136 = dma.done [#allocation5], 256
    $region65: #{tpu_custom_call.1} parent=1 // pred_fallthru
      _
    %1137 = vsyncpa [#allocation4], 1
    %1138 = vsyncpa [#allocation7], 1
    %1139 = vsyncpa [#allocation10], 1
    %1140 = vsyncpa [#allocation5], 1

</llo_original>
